<compile_context>
chip_gen: v7x
topology: tpu7x:2x2x1
jax: 0.10.0
libtpu: 0.0.40
codegen_flags: <defaults>
</compile_context>

<pallas_src>
import jax
import jax.numpy as jnp
from jax.experimental import pallas as pl
from jax.experimental.pallas import tpu as pltpu

NORM_EPS = 1e-12   # clamp for the SE(3) norm (applied as NORM_EPS**2 on the squared sum)
LN_EPS = 1e-5      # PyTorch nn.LayerNorm default eps


def _round_up(x, m):
    return ((x + m - 1) // m) * m


def _nonlin(x, kind):
    if kind == "elu":
        # exp(min(x,0)) keeps the unselected branch finite (safe if a VJP is added).
        return jnp.where(x > 0, x, jnp.exp(jnp.minimum(x, 0.0)) - 1.0)
    if kind == "relu":
        return jnp.maximum(x, 0.0)
    if kind == "tanh":
        return jnp.tanh(x)
    raise ValueError(f"unsupported nonlinearity: {kind}")


# ---------------------------------------------------------------------------
# Fused kernel: for every degree, (NormSE3 -> LinearSE3) x num_layers on one node tile.
# ---------------------------------------------------------------------------
def _make_kernel(degree_meta, nonlinearity):
    """degree_meta: tuple of (m_dim, num_layers) per degree (static)."""
    n_deg = len(degree_meta)

    def kernel(*refs):
        x_refs = refs[:n_deg]
        out_refs = refs[len(refs) - n_deg:]
        param_refs = refs[n_deg:len(refs) - n_deg]

        p = 0
        for di, (m_dim, n_layers) in enumerate(degree_meta):
            # h: python list over m of [C, N_TILE] f32 (channels on sublanes, nodes on lanes)
            h = [x_refs[di][m].astype(jnp.float32) for m in range(m_dim)]
            for _ in range(n_layers):
                gamma = param_refs[p][...]       # [C, 1]
                beta = param_refs[p + 1][...]    # [C, 1]
                w = param_refs[p + 2][...]       # [Cout, Cin]
                p += 3

                # --- NormSE3 fused into a single per-(c, n) scale ---
                sumsq = h[0] * h[0]
                for hm in h[1:]:
                    sumsq = sumsq + hm * hm
                sumsq = jnp.maximum(sumsq, NORM_EPS * NORM_EPS)  # == clamp(||x||, eps)
                inv = jax.lax.rsqrt(sumsq)                       # 1 / ||x||   (EUP)
                nrm = jnp.sqrt(sumsq)                            # ||x||        [C, N_TILE]
                mu = jnp.mean(nrm, axis=0, keepdims=True)        # LayerNorm over channels
                var = jnp.mean((nrm - mu) ** 2, axis=0, keepdims=True)
                ln = (nrm - mu) * jax.lax.rsqrt(var + LN_EPS) * gamma + beta
                scale = _nonlin(ln, nonlinearity) * inv          # [C, N_TILE]

                # --- LinearSE3: lane-dense MXU matmul per m ---
                h = [
                    jnp.dot(w, hm * scale, preferred_element_type=jnp.float32)
                    for hm in h
                ]

            for m in range(m_dim):
                out_refs[di][m] = h[m].astype(out_refs[di].dtype)

    return kernel


# ---------------------------------------------------------------------------
# Wrapper: single pallas_call over all degrees, tiled over nodes.
# ---------------------------------------------------------------------------
def structure_module(feats, params, *, nonlinearity="elu",
                     io_dtype=jnp.bfloat16, node_tile=512):
    """feats[d]: [N, C_in_d, 2d+1]; params[d]: [(gamma[C], beta[C], W[Cout,Cin])] per layer.

    Returns {d: [N, C_out_d, 2d+1]} float32.
    """
    degrees = sorted(feats.keys())
    n = feats[degrees[0]].shape[0]

    tn = min(int(node_tile), _round_up(max(n, 1), 128))
    tn = _round_up(tn, 128)
    n_pad = _round_up(n, tn)
    grid = (n_pad // tn,)

    x_args, x_specs = [], []
    out_shapes, out_specs = [], []
    degree_meta = []
    flops = trans = bytes_accessed = 0
    io_bytes = jnp.dtype(io_dtype).itemsize

    for d in degrees:
        m_dim = 2 * d + 1
        x = feats[d]
        assert x.shape[0] == n and x.shape[2] == m_dim, x.shape
        # single relayout: [N, C, M] -> [M, C, N]  (nodes on the lane axis)
        xt = jnp.transpose(x, (2, 1, 0)).astype(io_dtype)
        xt = jnp.pad(xt, ((0, 0), (0, 0), (0, n_pad - n)))
        c_in = xt.shape[1]
        c_out = params[d][-1][2].shape[0]

        x_args.append(xt)
        x_specs.append(pl.BlockSpec((m_dim, c_in, tn), lambda i: (0, 0, i)))
        out_shapes.append(jax.ShapeDtypeStruct((m_dim, c_out, n_pad), io_dtype))
        out_specs.append(pl.BlockSpec((m_dim, c_out, tn), lambda i: (0, 0, i)))
        degree_meta.append((m_dim, len(params[d])))

        bytes_accessed += m_dim * n_pad * (c_in + c_out) * io_bytes
        for _, _, w in params[d]:
            co, ci = w.shape
            flops += 2 * m_dim * n_pad * ci * co + 12 * m_dim * n_pad * ci
            trans += 3 * n_pad * ci
            bytes_accessed += (2 * ci + co * ci) * 4

    # Parameters: full-array blocks with constant index_maps -> stay resident in VMEM.
    p_args, p_specs = [], []
    for d in degrees:
        for gamma, beta, w in params[d]:
            c_in = w.shape[1]
            p_args.append(jnp.asarray(gamma, jnp.float32).reshape(c_in, 1))
            p_specs.append(pl.BlockSpec((c_in, 1), lambda i: (0, 0)))
            p_args.append(jnp.asarray(beta, jnp.float32).reshape(c_in, 1))
            p_specs.append(pl.BlockSpec((c_in, 1), lambda i: (0, 0)))
            p_args.append(jnp.asarray(w, jnp.float32))
            p_specs.append(pl.BlockSpec(tuple(w.shape), lambda i: (0, 0)))

    outs = pl.pallas_call(
        _make_kernel(tuple(degree_meta), nonlinearity),
        out_shape=tuple(out_shapes),
        grid=grid,
        in_specs=x_specs + p_specs,
        out_specs=tuple(out_specs),
        compiler_params=pltpu.CompilerParams(
            dimension_semantics=("parallel",),      # megacore sharding on v7x
            vmem_limit_bytes=32 * 1024 * 1024,      # tiles sized far below v7x's 64 MiB VMEM
        ),
        cost_estimate=pl.CostEstimate(
            flops=int(flops),
            transcendentals=int(trans),
            bytes_accessed=int(bytes_accessed),
        ),
    )(*x_args, *p_args)

    result = {}
    for d, o in zip(degrees, outs):
        o = o[:, :, :n]                                                # drop node padding
        result[d] = jnp.transpose(o, (2, 1, 0)).astype(jnp.float32)    # back to [N, Cout, M]
    return result


# ---------------------------------------------------------------------------
# Pure-JAX reference (identical math, PyTorch layout) for correctness checks.
# ---------------------------------------------------------------------------
def structure_module_ref(feats, params, *, nonlinearity="elu"):
    out = {}
    for d in sorted(feats.keys()):
        h = jnp.asarray(feats[d], jnp.float32)                                   # [N, C, M]
        for gamma, beta, w in params[d]:
            sumsq = jnp.maximum(jnp.sum(h * h, axis=-1), NORM_EPS * NORM_EPS)    # [N, C]
            nrm = jnp.sqrt(sumsq)
            inv = jax.lax.rsqrt(sumsq)
            mu = jnp.mean(nrm, axis=-1, keepdims=True)
            var = jnp.mean((nrm - mu) ** 2, axis=-1, keepdims=True)
            ln = (nrm - mu) * jax.lax.rsqrt(var + LN_EPS) * gamma + beta
            scale = _nonlin(ln, nonlinearity) * inv
            h = h * scale[..., None]
            h = jnp.einsum("oc,ncm->nom", w, h)
        out[d] = h
    return out


# ---------------------------------------------------------------------------
# Deterministic parameter construction (mirrors the module's __init__)
# ---------------------------------------------------------------------------
def build_params(key, config):
    """Per degree: [(gamma, beta, W)] for each (NormSE3, LinearSE3) pair."""
    fibers = [config["fiber_struct"]]
    for _ in range(config["num_linear_layers"] - 1):
        fibers.append(config["fiber_pass"])
    fibers.append(config["fiber_out"])

    params = {}
    for d in sorted(config["fiber_struct"].keys()):
        layers = []
        for li in range(config["num_linear_layers"]):
            c_in = fibers[li][d]
            c_out = fibers[li + 1][d]
            key, wk = jax.random.split(key)
            gamma = jnp.ones((c_in,), jnp.float32)      # LayerNorm weight
            beta = jnp.zeros((c_in,), jnp.float32)      # LayerNorm bias
            w = jax.random.normal(wk, (c_out, c_in), jnp.float32) / jnp.sqrt(float(c_in))
            layers.append((gamma, beta, w))
        params[d] = layers
    return params


# ---------------------------------------------------------------------------
if __name__ == "__main__":
    config = {
        "nonlinearity": "elu",
        "norm": [True],
        "num_linear_layers": 3,
        "fiber_struct": {0: 16, 1: 8},   # degree -> channels
        "fiber_pass":   {0: 16, 1: 8},
        "fiber_out":    {0: 4,  1: 2},
    }

    key = jax.random.PRNGKey(0)
    key, k0, k1 = jax.random.split(key, 3)

    n_nodes = 8
    feats = {
        0: jax.random.normal(k0, (n_nodes, config["fiber_struct"][0], 1), jnp.float32),
        1: jax.random.normal(k1, (n_nodes, config["fiber_struct"][1], 3), jnp.float32),
    }
    params = build_params(key, config)
    ref = structure_module_ref(feats, params, nonlinearity=config["nonlinearity"])

    # f32 HBM I/O: strict semantics check against the reference.
    out_f32 = structure_module(feats, params, nonlinearity=config["nonlinearity"],
                               io_dtype=jnp.float32)
    out_f32 = {d: jax.block_until_ready(v) for d, v in out_f32.items()}
    for d in feats:
        assert out_f32[d].shape == (n_nodes, config["fiber_out"][d], 2 * d + 1), out_f32[d].shape
        assert jnp.allclose(out_f32[d], ref[d], rtol=1e-4, atol=1e-4), f"f32 mismatch deg {d}"

    # default bf16 HBM I/O (memory-bound kernel -> half the DMA bytes); compute stays f32.
    out_bf16 = structure_module(feats, params, nonlinearity=config["nonlinearity"])
    out_bf16 = {d: jax.block_until_ready(v) for d, v in out_bf16.items()}
    feats_bf16 = {d: feats[d].astype(jnp.bfloat16).astype(jnp.float32) for d in feats}
    ref_bf16 = structure_module_ref(feats_bf16, params, nonlinearity=config["nonlinearity"])
    for d in feats:
        assert jnp.allclose(out_bf16[d], ref_bf16[d], rtol=5e-2, atol=5e-2), f"bf16 mismatch deg {d}"

    print("KERNEL_OK")
</pallas_src>

<mosaic_0001>
module attributes {stable_mosaic.version = 11 : i64} {
  func.func @kernel(%arg0: i32, %arg1: memref<1x16x128xf32, #tpu.memory_space<vmem>>, %arg2: memref<3x8x128xf32, #tpu.memory_space<vmem>>, %arg3: memref<16x1xf32, #tpu.memory_space<vmem>>, %arg4: memref<16x1xf32, #tpu.memory_space<vmem>>, %arg5: memref<16x16xf32, #tpu.memory_space<vmem>>, %arg6: memref<16x1xf32, #tpu.memory_space<vmem>>, %arg7: memref<16x1xf32, #tpu.memory_space<vmem>>, %arg8: memref<16x16xf32, #tpu.memory_space<vmem>>, %arg9: memref<16x1xf32, #tpu.memory_space<vmem>>, %arg10: memref<16x1xf32, #tpu.memory_space<vmem>>, %arg11: memref<4x16xf32, #tpu.memory_space<vmem>>, %arg12: memref<8x1xf32, #tpu.memory_space<vmem>>, %arg13: memref<8x1xf32, #tpu.memory_space<vmem>>, %arg14: memref<8x8xf32, #tpu.memory_space<vmem>>, %arg15: memref<8x1xf32, #tpu.memory_space<vmem>>, %arg16: memref<8x1xf32, #tpu.memory_space<vmem>>, %arg17: memref<8x8xf32, #tpu.memory_space<vmem>>, %arg18: memref<8x1xf32, #tpu.memory_space<vmem>>, %arg19: memref<8x1xf32, #tpu.memory_space<vmem>>, %arg20: memref<2x8xf32, #tpu.memory_space<vmem>>, %arg21: memref<1x4x128xf32, #tpu.memory_space<vmem>>, %arg22: memref<3x2x128xf32, #tpu.memory_space<vmem>>) attributes {dimension_semantics = [#tpu.dimension_semantics<parallel>], iteration_bounds = array<i64: 1>, scalar_prefetch = 0 : i64, scratch_operands = 0 : i64, tpu.core_type = #tpu.core_type<tc>, window_params = [{transform_indices = @transform_0, window_bounds = array<i64: 1, 16, 128>}, {transform_indices = @transform_1, window_bounds = array<i64: 3, 8, 128>}, {pipeline_mode = #tpu.pipeline_mode<synchronous>, transform_indices = @transform_2, window_bounds = array<i64: 16, 1>}, {pipeline_mode = #tpu.pipeline_mode<synchronous>, transform_indices = @transform_3, window_bounds = array<i64: 16, 1>}, {pipeline_mode = #tpu.pipeline_mode<synchronous>, transform_indices = @transform_4, window_bounds = array<i64: 16, 16>}, {pipeline_mode = #tpu.pipeline_mode<synchronous>, transform_indices = @transform_5, window_bounds = array<i64: 16, 1>}, {pipeline_mode = #tpu.pipeline_mode<synchronous>, transform_indices = @transform_6, window_bounds = array<i64: 16, 1>}, {pipeline_mode = #tpu.pipeline_mode<synchronous>, transform_indices = @transform_7, window_bounds = array<i64: 16, 16>}, {pipeline_mode = #tpu.pipeline_mode<synchronous>, transform_indices = @transform_8, window_bounds = array<i64: 16, 1>}, {pipeline_mode = #tpu.pipeline_mode<synchronous>, transform_indices = @transform_9, window_bounds = array<i64: 16, 1>}, {pipeline_mode = #tpu.pipeline_mode<synchronous>, transform_indices = @transform_10, window_bounds = array<i64: 4, 16>}, {pipeline_mode = #tpu.pipeline_mode<synchronous>, transform_indices = @transform_11, window_bounds = array<i64: 8, 1>}, {pipeline_mode = #tpu.pipeline_mode<synchronous>, transform_indices = @transform_12, window_bounds = array<i64: 8, 1>}, {pipeline_mode = #tpu.pipeline_mode<synchronous>, transform_indices = @transform_13, window_bounds = array<i64: 8, 8>}, {pipeline_mode = #tpu.pipeline_mode<synchronous>, transform_indices = @transform_14, window_bounds = array<i64: 8, 1>}, {pipeline_mode = #tpu.pipeline_mode<synchronous>, transform_indices = @transform_15, window_bounds = array<i64: 8, 1>}, {pipeline_mode = #tpu.pipeline_mode<synchronous>, transform_indices = @transform_16, window_bounds = array<i64: 8, 8>}, {pipeline_mode = #tpu.pipeline_mode<synchronous>, transform_indices = @transform_17, window_bounds = array<i64: 8, 1>}, {pipeline_mode = #tpu.pipeline_mode<synchronous>, transform_indices = @transform_18, window_bounds = array<i64: 8, 1>}, {pipeline_mode = #tpu.pipeline_mode<synchronous>, transform_indices = @transform_19, window_bounds = array<i64: 2, 8>}, {transform_indices = @transform_20, window_bounds = array<i64: 1, 4, 128>}, {transform_indices = @transform_21, window_bounds = array<i64: 3, 2, 128>}]} {
    %c0 = arith.constant 0 : index
    %c0_0 = arith.constant 0 : index
    %c0_1 = arith.constant 0 : index
    %0 = vector.load %arg1[%c0, %c0_0, %c0_1] : memref<1x16x128xf32, #tpu.memory_space<vmem>>, vector<1x16x128xf32>
    %1 = vector.shape_cast %0 : vector<1x16x128xf32> to vector<16x128xf32>
    %c0_2 = arith.constant 0 : index
    %c0_3 = arith.constant 0 : index
    %2 = vector.load %arg3[%c0_2, %c0_3] : memref<16x1xf32, #tpu.memory_space<vmem>>, vector<16x1xf32>
    %c0_4 = arith.constant 0 : index
    %c0_5 = arith.constant 0 : index
    %3 = vector.load %arg4[%c0_4, %c0_5] : memref<16x1xf32, #tpu.memory_space<vmem>>, vector<16x1xf32>
    %c0_6 = arith.constant 0 : index
    %c0_7 = arith.constant 0 : index
    %4 = vector.load %arg5[%c0_6, %c0_7] : memref<16x16xf32, #tpu.memory_space<vmem>>, vector<16x16xf32>
    %5 = arith.mulf %1, %1 : vector<16x128xf32>
    %cst = arith.constant 1.000000e-24 : f32
    %6 = vector.broadcast %cst : f32 to vector<16x128xf32>
    %7 = arith.maximumf %5, %6 : vector<16x128xf32>
    %8 = math.rsqrt %7 : vector<16x128xf32>
    %9 = math.sqrt %7 : vector<16x128xf32>
    %cst_8 = arith.constant dense<0.000000e+00> : vector<128xf32>
    %10 = vector.multi_reduction <add>, %9, %cst_8 [0] : vector<16x128xf32> to vector<128xf32>
    %11 = vector.shape_cast %10 : vector<128xf32> to vector<1x128xf32>
    %cst_9 = arith.constant 1.600000e+01 : f32
    %12 = vector.broadcast %cst_9 : f32 to vector<1x128xf32>
    %13 = arith.divf %11, %12 : vector<1x128xf32>
    %14 = vector.broadcast %13 : vector<1x128xf32> to vector<16x128xf32>
    %15 = arith.subf %9, %14 : vector<16x128xf32>
    %16 = arith.mulf %15, %15 : vector<16x128xf32>
    %cst_10 = arith.constant dense<0.000000e+00> : vector<128xf32>
    %17 = vector.multi_reduction <add>, %16, %cst_10 [0] : vector<16x128xf32> to vector<128xf32>
    %18 = vector.shape_cast %17 : vector<128xf32> to vector<1x128xf32>
    %cst_11 = arith.constant 1.600000e+01 : f32
    %19 = vector.broadcast %cst_11 : f32 to vector<1x128xf32>
    %20 = arith.divf %18, %19 : vector<1x128xf32>
    %21 = vector.broadcast %13 : vector<1x128xf32> to vector<16x128xf32>
    %22 = arith.subf %9, %21 : vector<16x128xf32>
    %cst_12 = arith.constant 9.99999974E-6 : f32
    %23 = vector.broadcast %cst_12 : f32 to vector<1x128xf32>
    %24 = arith.addf %20, %23 : vector<1x128xf32>
    %25 = math.rsqrt %24 : vector<1x128xf32>
    %26 = vector.broadcast %25 : vector<1x128xf32> to vector<16x128xf32>
    %27 = arith.mulf %22, %26 : vector<16x128xf32>
    %28 = vector.broadcast %2 : vector<16x1xf32> to vector<16x128xf32>
    %29 = arith.mulf %27, %28 : vector<16x128xf32>
    %30 = vector.broadcast %3 : vector<16x1xf32> to vector<16x128xf32>
    %31 = arith.addf %29, %30 : vector<16x128xf32>
    %cst_13 = arith.constant 0.000000e+00 : f32
    %32 = vector.broadcast %cst_13 : f32 to vector<16x128xf32>
    %33 = arith.cmpf ogt, %31, %32 : vector<16x128xf32>
    %cst_14 = arith.constant 0.000000e+00 : f32
    %34 = vector.broadcast %cst_14 : f32 to vector<16x128xf32>
    %35 = arith.minimumf %31, %34 : vector<16x128xf32>
    %36 = math.exp %35 : vector<16x128xf32>
    %cst_15 = arith.constant 1.000000e+00 : f32
    %37 = vector.broadcast %cst_15 : f32 to vector<16x128xf32>
    %38 = arith.subf %36, %37 : vector<16x128xf32>
    %39 = arith.select %33, %31, %38 : vector<16x128xi1>, vector<16x128xf32>
    %40 = arith.mulf %39, %8 : vector<16x128xf32>
    %41 = arith.mulf %1, %40 : vector<16x128xf32>
    %cst_16 = arith.constant dense<0.000000e+00> : vector<16x128xf32>
    %42 = tpu.matmul %4, %41, %cst_16 {dimension_numbers = #tpu.dot_dimension_numbers<[1], [0], [0], [1], [0, 0, 1, 1], [], []>} : vector<16x16xf32>, vector<16x128xf32>, vector<16x128xf32> -> vector<16x128xf32>
    %c0_17 = arith.constant 0 : index
    %c0_18 = arith.constant 0 : index
    %43 = vector.load %arg6[%c0_17, %c0_18] : memref<16x1xf32, #tpu.memory_space<vmem>>, vector<16x1xf32>
    %c0_19 = arith.constant 0 : index
    %c0_20 = arith.constant 0 : index
    %44 = vector.load %arg7[%c0_19, %c0_20] : memref<16x1xf32, #tpu.memory_space<vmem>>, vector<16x1xf32>
    %c0_21 = arith.constant 0 : index
    %c0_22 = arith.constant 0 : index
    %45 = vector.load %arg8[%c0_21, %c0_22] : memref<16x16xf32, #tpu.memory_space<vmem>>, vector<16x16xf32>
    %46 = arith.mulf %42, %42 : vector<16x128xf32>
    %cst_23 = arith.constant 1.000000e-24 : f32
    %47 = vector.broadcast %cst_23 : f32 to vector<16x128xf32>
    %48 = arith.maximumf %46, %47 : vector<16x128xf32>
    %49 = math.rsqrt %48 : vector<16x128xf32>
    %50 = math.sqrt %48 : vector<16x128xf32>
    %cst_24 = arith.constant dense<0.000000e+00> : vector<128xf32>
    %51 = vector.multi_reduction <add>, %50, %cst_24 [0] : vector<16x128xf32> to vector<128xf32>
    %52 = vector.shape_cast %51 : vector<128xf32> to vector<1x128xf32>
    %cst_25 = arith.constant 1.600000e+01 : f32
    %53 = vector.broadcast %cst_25 : f32 to vector<1x128xf32>
    %54 = arith.divf %52, %53 : vector<1x128xf32>
    %55 = vector.broadcast %54 : vector<1x128xf32> to vector<16x128xf32>
    %56 = arith.subf %50, %55 : vector<16x128xf32>
    %57 = arith.mulf %56, %56 : vector<16x128xf32>
    %cst_26 = arith.constant dense<0.000000e+00> : vector<128xf32>
    %58 = vector.multi_reduction <add>, %57, %cst_26 [0] : vector<16x128xf32> to vector<128xf32>
    %59 = vector.shape_cast %58 : vector<128xf32> to vector<1x128xf32>
    %cst_27 = arith.constant 1.600000e+01 : f32
    %60 = vector.broadcast %cst_27 : f32 to vector<1x128xf32>
    %61 = arith.divf %59, %60 : vector<1x128xf32>
    %62 = vector.broadcast %54 : vector<1x128xf32> to vector<16x128xf32>
    %63 = arith.subf %50, %62 : vector<16x128xf32>
    %cst_28 = arith.constant 9.99999974E-6 : f32
    %64 = vector.broadcast %cst_28 : f32 to vector<1x128xf32>
    %65 = arith.addf %61, %64 : vector<1x128xf32>
    %66 = math.rsqrt %65 : vector<1x128xf32>
    %67 = vector.broadcast %66 : vector<1x128xf32> to vector<16x128xf32>
    %68 = arith.mulf %63, %67 : vector<16x128xf32>
    %69 = vector.broadcast %43 : vector<16x1xf32> to vector<16x128xf32>
    %70 = arith.mulf %68, %69 : vector<16x128xf32>
    %71 = vector.broadcast %44 : vector<16x1xf32> to vector<16x128xf32>
    %72 = arith.addf %70, %71 : vector<16x128xf32>
    %cst_29 = arith.constant 0.000000e+00 : f32
    %73 = vector.broadcast %cst_29 : f32 to vector<16x128xf32>
    %74 = arith.cmpf ogt, %72, %73 : vector<16x128xf32>
    %cst_30 = arith.constant 0.000000e+00 : f32
    %75 = vector.broadcast %cst_30 : f32 to vector<16x128xf32>
    %76 = arith.minimumf %72, %75 : vector<16x128xf32>
    %77 = math.exp %76 : vector<16x128xf32>
    %cst_31 = arith.constant 1.000000e+00 : f32
    %78 = vector.broadcast %cst_31 : f32 to vector<16x128xf32>
    %79 = arith.subf %77, %78 : vector<16x128xf32>
    %80 = arith.select %74, %72, %79 : vector<16x128xi1>, vector<16x128xf32>
    %81 = arith.mulf %80, %49 : vector<16x128xf32>
    %82 = arith.mulf %42, %81 : vector<16x128xf32>
    %cst_32 = arith.constant dense<0.000000e+00> : vector<16x128xf32>
    %83 = tpu.matmul %45, %82, %cst_32 {dimension_numbers = #tpu.dot_dimension_numbers<[1], [0], [0], [1], [0, 0, 1, 1], [], []>} : vector<16x16xf32>, vector<16x128xf32>, vector<16x128xf32> -> vector<16x128xf32>
    %c0_33 = arith.constant 0 : index
    %c0_34 = arith.constant 0 : index
    %84 = vector.load %arg9[%c0_33, %c0_34] : memref<16x1xf32, #tpu.memory_space<vmem>>, vector<16x1xf32>
    %c0_35 = arith.constant 0 : index
    %c0_36 = arith.constant 0 : index
    %85 = vector.load %arg10[%c0_35, %c0_36] : memref<16x1xf32, #tpu.memory_space<vmem>>, vector<16x1xf32>
    %c0_37 = arith.constant 0 : index
    %c0_38 = arith.constant 0 : index
    %86 = vector.load %arg11[%c0_37, %c0_38] : memref<4x16xf32, #tpu.memory_space<vmem>>, vector<4x16xf32>
    %87 = arith.mulf %83, %83 : vector<16x128xf32>
    %cst_39 = arith.constant 1.000000e-24 : f32
    %88 = vector.broadcast %cst_39 : f32 to vector<16x128xf32>
    %89 = arith.maximumf %87, %88 : vector<16x128xf32>
    %90 = math.rsqrt %89 : vector<16x128xf32>
    %91 = math.sqrt %89 : vector<16x128xf32>
    %cst_40 = arith.constant dense<0.000000e+00> : vector<128xf32>
    %92 = vector.multi_reduction <add>, %91, %cst_40 [0] : vector<16x128xf32> to vector<128xf32>
    %93 = vector.shape_cast %92 : vector<128xf32> to vector<1x128xf32>
    %cst_41 = arith.constant 1.600000e+01 : f32
    %94 = vector.broadcast %cst_41 : f32 to vector<1x128xf32>
    %95 = arith.divf %93, %94 : vector<1x128xf32>
    %96 = vector.broadcast %95 : vector<1x128xf32> to vector<16x128xf32>
    %97 = arith.subf %91, %96 : vector<16x128xf32>
    %98 = arith.mulf %97, %97 : vector<16x128xf32>
    %cst_42 = arith.constant dense<0.000000e+00> : vector<128xf32>
    %99 = vector.multi_reduction <add>, %98, %cst_42 [0] : vector<16x128xf32> to vector<128xf32>
    %100 = vector.shape_cast %99 : vector<128xf32> to vector<1x128xf32>
    %cst_43 = arith.constant 1.600000e+01 : f32
    %101 = vector.broadcast %cst_43 : f32 to vector<1x128xf32>
    %102 = arith.divf %100, %101 : vector<1x128xf32>
    %103 = vector.broadcast %95 : vector<1x128xf32> to vector<16x128xf32>
    %104 = arith.subf %91, %103 : vector<16x128xf32>
    %cst_44 = arith.constant 9.99999974E-6 : f32
    %105 = vector.broadcast %cst_44 : f32 to vector<1x128xf32>
    %106 = arith.addf %102, %105 : vector<1x128xf32>
    %107 = math.rsqrt %106 : vector<1x128xf32>
    %108 = vector.broadcast %107 : vector<1x128xf32> to vector<16x128xf32>
    %109 = arith.mulf %104, %108 : vector<16x128xf32>
    %110 = vector.broadcast %84 : vector<16x1xf32> to vector<16x128xf32>
    %111 = arith.mulf %109, %110 : vector<16x128xf32>
    %112 = vector.broadcast %85 : vector<16x1xf32> to vector<16x128xf32>
    %113 = arith.addf %111, %112 : vector<16x128xf32>
    %cst_45 = arith.constant 0.000000e+00 : f32
    %114 = vector.broadcast %cst_45 : f32 to vector<16x128xf32>
    %115 = arith.cmpf ogt, %113, %114 : vector<16x128xf32>
    %cst_46 = arith.constant 0.000000e+00 : f32
    %116 = vector.broadcast %cst_46 : f32 to vector<16x128xf32>
    %117 = arith.minimumf %113, %116 : vector<16x128xf32>
    %118 = math.exp %117 : vector<16x128xf32>
    %cst_47 = arith.constant 1.000000e+00 : f32
    %119 = vector.broadcast %cst_47 : f32 to vector<16x128xf32>
    %120 = arith.subf %118, %119 : vector<16x128xf32>
    %121 = arith.select %115, %113, %120 : vector<16x128xi1>, vector<16x128xf32>
    %122 = arith.mulf %121, %90 : vector<16x128xf32>
    %123 = arith.mulf %83, %122 : vector<16x128xf32>
    %cst_48 = arith.constant dense<0.000000e+00> : vector<4x128xf32>
    %124 = tpu.matmul %86, %123, %cst_48 {dimension_numbers = #tpu.dot_dimension_numbers<[1], [0], [0], [1], [0, 0, 1, 1], [], []>} : vector<4x16xf32>, vector<16x128xf32>, vector<4x128xf32> -> vector<4x128xf32>
    %c0_49 = arith.constant 0 : index
    %c0_50 = arith.constant 0 : index
    %c0_51 = arith.constant 0 : index
    %125 = vector.load %arg21[%c0_49, %c0_50, %c0_51] : memref<1x4x128xf32, #tpu.memory_space<vmem>>, vector<1x4x128xf32>
    %126 = vector.shape_cast %125 : vector<1x4x128xf32> to vector<4x128xf32>
    %127 = vector.shape_cast %124 : vector<4x128xf32> to vector<1x4x128xf32>
    tpu.vector_store %arg21[%c0_49, %c0_50, %c0_51], %127 {strides = array<i32>} : memref<1x4x128xf32, #tpu.memory_space<vmem>>, vector<1x4x128xf32>,
    %c0_52 = arith.constant 0 : index
    %c0_53 = arith.constant 0 : index
    %c0_54 = arith.constant 0 : index
    %128 = vector.load %arg2[%c0_52, %c0_53, %c0_54] : memref<3x8x128xf32, #tpu.memory_space<vmem>>, vector<1x8x128xf32>
    %129 = vector.shape_cast %128 : vector<1x8x128xf32> to vector<8x128xf32>
    %c1 = arith.constant 1 : index
    %c0_55 = arith.constant 0 : index
    %c0_56 = arith.constant 0 : index
    %130 = vector.load %arg2[%c1, %c0_55, %c0_56] : memref<3x8x128xf32, #tpu.memory_space<vmem>>, vector<1x8x128xf32>
    %131 = vector.shape_cast %130 : vector<1x8x128xf32> to vector<8x128xf32>
    %c2 = arith.constant 2 : index
    %c0_57 = arith.constant 0 : index
    %c0_58 = arith.constant 0 : index
    %132 = vector.load %arg2[%c2, %c0_57, %c0_58] : memref<3x8x128xf32, #tpu.memory_space<vmem>>, vector<1x8x128xf32>
    %133 = vector.shape_cast %132 : vector<1x8x128xf32> to vector<8x128xf32>
    %c0_59 = arith.constant 0 : index
    %c0_60 = arith.constant 0 : index
    %134 = vector.load %arg12[%c0_59, %c0_60] : memref<8x1xf32, #tpu.memory_space<vmem>>, vector<8x1xf32>
    %c0_61 = arith.constant 0 : index
    %c0_62 = arith.constant 0 : index
    %135 = vector.load %arg13[%c0_61, %c0_62] : memref<8x1xf32, #tpu.memory_space<vmem>>, vector<8x1xf32>
    %c0_63 = arith.constant 0 : index
    %c0_64 = arith.constant 0 : index
    %136 = vector.load %arg14[%c0_63, %c0_64] : memref<8x8xf32, #tpu.memory_space<vmem>>, vector<8x8xf32>
    %137 = arith.mulf %129, %129 : vector<8x128xf32>
    %138 = arith.mulf %131, %131 : vector<8x128xf32>
    %139 = arith.addf %137, %138 : vector<8x128xf32>
    %140 = arith.mulf %133, %133 : vector<8x128xf32>
    %141 = arith.addf %139, %140 : vector<8x128xf32>
    %cst_65 = arith.constant 1.000000e-24 : f32
    %142 = vector.broadcast %cst_65 : f32 to vector<8x128xf32>
    %143 = arith.maximumf %141, %142 : vector<8x128xf32>
    %144 = math.rsqrt %143 : vector<8x128xf32>
    %145 = math.sqrt %143 : vector<8x128xf32>
    %cst_66 = arith.constant dense<0.000000e+00> : vector<128xf32>
    %146 = vector.multi_reduction <add>, %145, %cst_66 [0] : vector<8x128xf32> to vector<128xf32>
    %147 = vector.shape_cast %146 : vector<128xf32> to vector<1x128xf32>
    %cst_67 = arith.constant 8.000000e+00 : f32
    %148 = vector.broadcast %cst_67 : f32 to vector<1x128xf32>
    %149 = arith.divf %147, %148 : vector<1x128xf32>
    %150 = vector.broadcast %149 : vector<1x128xf32> to vector<8x128xf32>
    %151 = arith.subf %145, %150 : vector<8x128xf32>
    %152 = arith.mulf %151, %151 : vector<8x128xf32>
    %cst_68 = arith.constant dense<0.000000e+00> : vector<128xf32>
    %153 = vector.multi_reduction <add>, %152, %cst_68 [0] : vector<8x128xf32> to vector<128xf32>
    %154 = vector.shape_cast %153 : vector<128xf32> to vector<1x128xf32>
    %cst_69 = arith.constant 8.000000e+00 : f32
    %155 = vector.broadcast %cst_69 : f32 to vector<1x128xf32>
    %156 = arith.divf %154, %155 : vector<1x128xf32>
    %157 = vector.broadcast %149 : vector<1x128xf32> to vector<8x128xf32>
    %158 = arith.subf %145, %157 : vector<8x128xf32>
    %cst_70 = arith.constant 9.99999974E-6 : f32
    %159 = vector.broadcast %cst_70 : f32 to vector<1x128xf32>
    %160 = arith.addf %156, %159 : vector<1x128xf32>
    %161 = math.rsqrt %160 : vector<1x128xf32>
    %162 = vector.broadcast %161 : vector<1x128xf32> to vector<8x128xf32>
    %163 = arith.mulf %158, %162 : vector<8x128xf32>
    %164 = vector.broadcast %134 : vector<8x1xf32> to vector<8x128xf32>
    %165 = arith.mulf %163, %164 : vector<8x128xf32>
    %166 = vector.broadcast %135 : vector<8x1xf32> to vector<8x128xf32>
    %167 = arith.addf %165, %166 : vector<8x128xf32>
    %cst_71 = arith.constant 0.000000e+00 : f32
    %168 = vector.broadcast %cst_71 : f32 to vector<8x128xf32>
    %169 = arith.cmpf ogt, %167, %168 : vector<8x128xf32>
    %cst_72 = arith.constant 0.000000e+00 : f32
    %170 = vector.broadcast %cst_72 : f32 to vector<8x128xf32>
    %171 = arith.minimumf %167, %170 : vector<8x128xf32>
    %172 = math.exp %171 : vector<8x128xf32>
    %cst_73 = arith.constant 1.000000e+00 : f32
    %173 = vector.broadcast %cst_73 : f32 to vector<8x128xf32>
    %174 = arith.subf %172, %173 : vector<8x128xf32>
    %175 = arith.select %169, %167, %174 : vector<8x128xi1>, vector<8x128xf32>
    %176 = arith.mulf %175, %144 : vector<8x128xf32>
    %177 = arith.mulf %129, %176 : vector<8x128xf32>
    %cst_74 = arith.constant dense<0.000000e+00> : vector<8x128xf32>
    %178 = tpu.matmul %136, %177, %cst_74 {dimension_numbers = #tpu.dot_dimension_numbers<[1], [0], [0], [1], [0, 0, 1, 1], [], []>} : vector<8x8xf32>, vector<8x128xf32>, vector<8x128xf32> -> vector<8x128xf32>
    %179 = arith.mulf %131, %176 : vector<8x128xf32>
    %cst_75 = arith.constant dense<0.000000e+00> : vector<8x128xf32>
    %180 = tpu.matmul %136, %179, %cst_75 {dimension_numbers = #tpu.dot_dimension_numbers<[1], [0], [0], [1], [0, 0, 1, 1], [], []>} : vector<8x8xf32>, vector<8x128xf32>, vector<8x128xf32> -> vector<8x128xf32>
    %181 = arith.mulf %133, %176 : vector<8x128xf32>
    %cst_76 = arith.constant dense<0.000000e+00> : vector<8x128xf32>
    %182 = tpu.matmul %136, %181, %cst_76 {dimension_numbers = #tpu.dot_dimension_numbers<[1], [0], [0], [1], [0, 0, 1, 1], [], []>} : vector<8x8xf32>, vector<8x128xf32>, vector<8x128xf32> -> vector<8x128xf32>
    %c0_77 = arith.constant 0 : index
    %c0_78 = arith.constant 0 : index
    %183 = vector.load %arg15[%c0_77, %c0_78] : memref<8x1xf32, #tpu.memory_space<vmem>>, vector<8x1xf32>
    %c0_79 = arith.constant 0 : index
    %c0_80 = arith.constant 0 : index
    %184 = vector.load %arg16[%c0_79, %c0_80] : memref<8x1xf32, #tpu.memory_space<vmem>>, vector<8x1xf32>
    %c0_81 = arith.constant 0 : index
    %c0_82 = arith.constant 0 : index
    %185 = vector.load %arg17[%c0_81, %c0_82] : memref<8x8xf32, #tpu.memory_space<vmem>>, vector<8x8xf32>
    %186 = arith.mulf %178, %178 : vector<8x128xf32>
    %187 = arith.mulf %180, %180 : vector<8x128xf32>
    %188 = arith.addf %186, %187 : vector<8x128xf32>
    %189 = arith.mulf %182, %182 : vector<8x128xf32>
    %190 = arith.addf %188, %189 : vector<8x128xf32>
    %cst_83 = arith.constant 1.000000e-24 : f32
    %191 = vector.broadcast %cst_83 : f32 to vector<8x128xf32>
    %192 = arith.maximumf %190, %191 : vector<8x128xf32>
    %193 = math.rsqrt %192 : vector<8x128xf32>
    %194 = math.sqrt %192 : vector<8x128xf32>
    %cst_84 = arith.constant dense<0.000000e+00> : vector<128xf32>
    %195 = vector.multi_reduction <add>, %194, %cst_84 [0] : vector<8x128xf32> to vector<128xf32>
    %196 = vector.shape_cast %195 : vector<128xf32> to vector<1x128xf32>
    %cst_85 = arith.constant 8.000000e+00 : f32
    %197 = vector.broadcast %cst_85 : f32 to vector<1x128xf32>
    %198 = arith.divf %196, %197 : vector<1x128xf32>
    %199 = vector.broadcast %198 : vector<1x128xf32> to vector<8x128xf32>
    %200 = arith.subf %194, %199 : vector<8x128xf32>
    %201 = arith.mulf %200, %200 : vector<8x128xf32>
    %cst_86 = arith.constant dense<0.000000e+00> : vector<128xf32>
    %202 = vector.multi_reduction <add>, %201, %cst_86 [0] : vector<8x128xf32> to vector<128xf32>
    %203 = vector.shape_cast %202 : vector<128xf32> to vector<1x128xf32>
    %cst_87 = arith.constant 8.000000e+00 : f32
    %204 = vector.broadcast %cst_87 : f32 to vector<1x128xf32>
    %205 = arith.divf %203, %204 : vector<1x128xf32>
    %206 = vector.broadcast %198 : vector<1x128xf32> to vector<8x128xf32>
    %207 = arith.subf %194, %206 : vector<8x128xf32>
    %cst_88 = arith.constant 9.99999974E-6 : f32
    %208 = vector.broadcast %cst_88 : f32 to vector<1x128xf32>
    %209 = arith.addf %205, %208 : vector<1x128xf32>
    %210 = math.rsqrt %209 : vector<1x128xf32>
    %211 = vector.broadcast %210 : vector<1x128xf32> to vector<8x128xf32>
    %212 = arith.mulf %207, %211 : vector<8x128xf32>
    %213 = vector.broadcast %183 : vector<8x1xf32> to vector<8x128xf32>
    %214 = arith.mulf %212, %213 : vector<8x128xf32>
    %215 = vector.broadcast %184 : vector<8x1xf32> to vector<8x128xf32>
    %216 = arith.addf %214, %215 : vector<8x128xf32>
    %cst_89 = arith.constant 0.000000e+00 : f32
    %217 = vector.broadcast %cst_89 : f32 to vector<8x128xf32>
    %218 = arith.cmpf ogt, %216, %217 : vector<8x128xf32>
    %cst_90 = arith.constant 0.000000e+00 : f32
    %219 = vector.broadcast %cst_90 : f32 to vector<8x128xf32>
    %220 = arith.minimumf %216, %219 : vector<8x128xf32>
    %221 = math.exp %220 : vector<8x128xf32>
    %cst_91 = arith.constant 1.000000e+00 : f32
    %222 = vector.broadcast %cst_91 : f32 to vector<8x128xf32>
    %223 = arith.subf %221, %222 : vector<8x128xf32>
    %224 = arith.select %218, %216, %223 : vector<8x128xi1>, vector<8x128xf32>
    %225 = arith.mulf %224, %193 : vector<8x128xf32>
    %226 = arith.mulf %178, %225 : vector<8x128xf32>
    %cst_92 = arith.constant dense<0.000000e+00> : vector<8x128xf32>
    %227 = tpu.matmul %185, %226, %cst_92 {dimension_numbers = #tpu.dot_dimension_numbers<[1], [0], [0], [1], [0, 0, 1, 1], [], []>} : vector<8x8xf32>, vector<8x128xf32>, vector<8x128xf32> -> vector<8x128xf32>
    %228 = arith.mulf %180, %225 : vector<8x128xf32>
    %cst_93 = arith.constant dense<0.000000e+00> : vector<8x128xf32>
    %229 = tpu.matmul %185, %228, %cst_93 {dimension_numbers = #tpu.dot_dimension_numbers<[1], [0], [0], [1], [0, 0, 1, 1], [], []>} : vector<8x8xf32>, vector<8x128xf32>, vector<8x128xf32> -> vector<8x128xf32>
    %230 = arith.mulf %182, %225 : vector<8x128xf32>
    %cst_94 = arith.constant dense<0.000000e+00> : vector<8x128xf32>
    %231 = tpu.matmul %185, %230, %cst_94 {dimension_numbers = #tpu.dot_dimension_numbers<[1], [0], [0], [1], [0, 0, 1, 1], [], []>} : vector<8x8xf32>, vector<8x128xf32>, vector<8x128xf32> -> vector<8x128xf32>
    %c0_95 = arith.constant 0 : index
    %c0_96 = arith.constant 0 : index
    %232 = vector.load %arg18[%c0_95, %c0_96] : memref<8x1xf32, #tpu.memory_space<vmem>>, vector<8x1xf32>
    %c0_97 = arith.constant 0 : index
    %c0_98 = arith.constant 0 : index
    %233 = vector.load %arg19[%c0_97, %c0_98] : memref<8x1xf32, #tpu.memory_space<vmem>>, vector<8x1xf32>
    %c0_99 = arith.constant 0 : index
    %c0_100 = arith.constant 0 : index
    %234 = vector.load %arg20[%c0_99, %c0_100] : memref<2x8xf32, #tpu.memory_space<vmem>>, vector<2x8xf32>
    %235 = arith.mulf %227, %227 : vector<8x128xf32>
    %236 = arith.mulf %229, %229 : vector<8x128xf32>
    %237 = arith.addf %235, %236 : vector<8x128xf32>
    %238 = arith.mulf %231, %231 : vector<8x128xf32>
    %239 = arith.addf %237, %238 : vector<8x128xf32>
    %cst_101 = arith.constant 1.000000e-24 : f32
    %240 = vector.broadcast %cst_101 : f32 to vector<8x128xf32>
    %241 = arith.maximumf %239, %240 : vector<8x128xf32>
    %242 = math.rsqrt %241 : vector<8x128xf32>
    %243 = math.sqrt %241 : vector<8x128xf32>
    %cst_102 = arith.constant dense<0.000000e+00> : vector<128xf32>
    %244 = vector.multi_reduction <add>, %243, %cst_102 [0] : vector<8x128xf32> to vector<128xf32>
    %245 = vector.shape_cast %244 : vector<128xf32> to vector<1x128xf32>
    %cst_103 = arith.constant 8.000000e+00 : f32
    %246 = vector.broadcast %cst_103 : f32 to vector<1x128xf32>
    %247 = arith.divf %245, %246 : vector<1x128xf32>
    %248 = vector.broadcast %247 : vector<1x128xf32> to vector<8x128xf32>
    %249 = arith.subf %243, %248 : vector<8x128xf32>
    %250 = arith.mulf %249, %249 : vector<8x128xf32>
    %cst_104 = arith.constant dense<0.000000e+00> : vector<128xf32>
    %251 = vector.multi_reduction <add>, %250, %cst_104 [0] : vector<8x128xf32> to vector<128xf32>
    %252 = vector.shape_cast %251 : vector<128xf32> to vector<1x128xf32>
    %cst_105 = arith.constant 8.000000e+00 : f32
    %253 = vector.broadcast %cst_105 : f32 to vector<1x128xf32>
    %254 = arith.divf %252, %253 : vector<1x128xf32>
    %255 = vector.broadcast %247 : vector<1x128xf32> to vector<8x128xf32>
    %256 = arith.subf %243, %255 : vector<8x128xf32>
    %cst_106 = arith.constant 9.99999974E-6 : f32
    %257 = vector.broadcast %cst_106 : f32 to vector<1x128xf32>
    %258 = arith.addf %254, %257 : vector<1x128xf32>
    %259 = math.rsqrt %258 : vector<1x128xf32>
    %260 = vector.broadcast %259 : vector<1x128xf32> to vector<8x128xf32>
    %261 = arith.mulf %256, %260 : vector<8x128xf32>
    %262 = vector.broadcast %232 : vector<8x1xf32> to vector<8x128xf32>
    %263 = arith.mulf %261, %262 : vector<8x128xf32>
    %264 = vector.broadcast %233 : vector<8x1xf32> to vector<8x128xf32>
    %265 = arith.addf %263, %264 : vector<8x128xf32>
    %cst_107 = arith.constant 0.000000e+00 : f32
    %266 = vector.broadcast %cst_107 : f32 to vector<8x128xf32>
    %267 = arith.cmpf ogt, %265, %266 : vector<8x128xf32>
    %cst_108 = arith.constant 0.000000e+00 : f32
    %268 = vector.broadcast %cst_108 : f32 to vector<8x128xf32>
    %269 = arith.minimumf %265, %268 : vector<8x128xf32>
    %270 = math.exp %269 : vector<8x128xf32>
    %cst_109 = arith.constant 1.000000e+00 : f32
    %271 = vector.broadcast %cst_109 : f32 to vector<8x128xf32>
    %272 = arith.subf %270, %271 : vector<8x128xf32>
    %273 = arith.select %267, %265, %272 : vector<8x128xi1>, vector<8x128xf32>
    %274 = arith.mulf %273, %242 : vector<8x128xf32>
    %275 = arith.mulf %227, %274 : vector<8x128xf32>
    %cst_110 = arith.constant dense<0.000000e+00> : vector<2x128xf32>
    %276 = tpu.matmul %234, %275, %cst_110 {dimension_numbers = #tpu.dot_dimension_numbers<[1], [0], [0], [1], [0, 0, 1, 1], [], []>} : vector<2x8xf32>, vector<8x128xf32>, vector<2x128xf32> -> vector<2x128xf32>
    %277 = arith.mulf %229, %274 : vector<8x128xf32>
    %cst_111 = arith.constant dense<0.000000e+00> : vector<2x128xf32>
    %278 = tpu.matmul %234, %277, %cst_111 {dimension_numbers = #tpu.dot_dimension_numbers<[1], [0], [0], [1], [0, 0, 1, 1], [], []>} : vector<2x8xf32>, vector<8x128xf32>, vector<2x128xf32> -> vector<2x128xf32>
    %279 = arith.mulf %231, %274 : vector<8x128xf32>
    %cst_112 = arith.constant dense<0.000000e+00> : vector<2x128xf32>
    %280 = tpu.matmul %234, %279, %cst_112 {dimension_numbers = #tpu.dot_dimension_numbers<[1], [0], [0], [1], [0, 0, 1, 1], [], []>} : vector<2x8xf32>, vector<8x128xf32>, vector<2x128xf32> -> vector<2x128xf32>
    %c0_113 = arith.constant 0 : index
    %c0_114 = arith.constant 0 : index
    %c0_115 = arith.constant 0 : index
    %281 = vector.load %arg22[%c0_113, %c0_114, %c0_115] : memref<3x2x128xf32, #tpu.memory_space<vmem>>, vector<1x2x128xf32>
    %282 = vector.shape_cast %281 : vector<1x2x128xf32> to vector<2x128xf32>
    %283 = vector.shape_cast %276 : vector<2x128xf32> to vector<1x2x128xf32>
    tpu.vector_store %arg22[%c0_113, %c0_114, %c0_115], %283 {strides = array<i32>} : memref<3x2x128xf32, #tpu.memory_space<vmem>>, vector<1x2x128xf32>,
    %c1_116 = arith.constant 1 : index
    %c0_117 = arith.constant 0 : index
    %c0_118 = arith.constant 0 : index
    %284 = vector.load %arg22[%c1_116, %c0_117, %c0_118] : memref<3x2x128xf32, #tpu.memory_space<vmem>>, vector<1x2x128xf32>
    %285 = vector.shape_cast %284 : vector<1x2x128xf32> to vector<2x128xf32>
    %286 = vector.shape_cast %278 : vector<2x128xf32> to vector<1x2x128xf32>
    tpu.vector_store %arg22[%c1_116, %c0_117, %c0_118], %286 {strides = array<i32>} : memref<3x2x128xf32, #tpu.memory_space<vmem>>, vector<1x2x128xf32>,
    %c2_119 = arith.constant 2 : index
    %c0_120 = arith.constant 0 : index
    %c0_121 = arith.constant 0 : index
    %287 = vector.load %arg22[%c2_119, %c0_120, %c0_121] : memref<3x2x128xf32, #tpu.memory_space<vmem>>, vector<1x2x128xf32>
    %288 = vector.shape_cast %287 : vector<1x2x128xf32> to vector<2x128xf32>
    %289 = vector.shape_cast %280 : vector<2x128xf32> to vector<1x2x128xf32>
    tpu.vector_store %arg22[%c2_119, %c0_120, %c0_121], %289 {strides = array<i32>} : memref<3x2x128xf32, #tpu.memory_space<vmem>>, vector<1x2x128xf32>,
    return
  }
  func.func @transform_0(%arg0: i32) -> (i32, i32, i32) {
    %c0_i32 = arith.constant 0 : i32
    %c0_i32_0 = arith.constant 0 : i32
    %c0_i32_1 = arith.constant 0 : i32
    return %c0_i32, %c0_i32_0, %arg0 : i32, i32, i32
  }
  func.func @transform_1(%arg0: i32) -> (i32, i32, i32) {
    %c0_i32 = arith.constant 0 : i32
    %c0_i32_0 = arith.constant 0 : i32
    %c0_i32_1 = arith.constant 0 : i32
    return %c0_i32, %c0_i32_0, %arg0 : i32, i32, i32
  }
  func.func @transform_2(%arg0: i32) -> (i32, i32) {
    %c0_i32 = arith.constant 0 : i32
    %c0_i32_0 = arith.constant 0 : i32
    %c0_i32_1 = arith.constant 0 : i32
    return %c0_i32, %c0_i32_0 : i32, i32
  }
  func.func @transform_3(%arg0: i32) -> (i32, i32) {
    %c0_i32 = arith.constant 0 : i32
    %c0_i32_0 = arith.constant 0 : i32
    %c0_i32_1 = arith.constant 0 : i32
    return %c0_i32, %c0_i32_0 : i32, i32
  }
  func.func @transform_4(%arg0: i32) -> (i32, i32) {
    %c0_i32 = arith.constant 0 : i32
    %c0_i32_0 = arith.constant 0 : i32
    %c0_i32_1 = arith.constant 0 : i32
    return %c0_i32, %c0_i32_0 : i32, i32
  }
  func.func @transform_5(%arg0: i32) -> (i32, i32) {
    %c0_i32 = arith.constant 0 : i32
    %c0_i32_0 = arith.constant 0 : i32
    %c0_i32_1 = arith.constant 0 : i32
    return %c0_i32, %c0_i32_0 : i32, i32
  }
  func.func @transform_6(%arg0: i32) -> (i32, i32) {
    %c0_i32 = arith.constant 0 : i32
    %c0_i32_0 = arith.constant 0 : i32
    %c0_i32_1 = arith.constant 0 : i32
    return %c0_i32, %c0_i32_0 : i32, i32
  }
  func.func @transform_7(%arg0: i32) -> (i32, i32) {
    %c0_i32 = arith.constant 0 : i32
    %c0_i32_0 = arith.constant 0 : i32
    %c0_i32_1 = arith.constant 0 : i32
    return %c0_i32, %c0_i32_0 : i32, i32
  }
  func.func @transform_8(%arg0: i32) -> (i32, i32) {
    %c0_i32 = arith.constant 0 : i32
    %c0_i32_0 = arith.constant 0 : i32
    %c0_i32_1 = arith.constant 0 : i32
    return %c0_i32, %c0_i32_0 : i32, i32
  }
  func.func @transform_9(%arg0: i32) -> (i32, i32) {
    %c0_i32 = arith.constant 0 : i32
    %c0_i32_0 = arith.constant 0 : i32
    %c0_i32_1 = arith.constant 0 : i32
    return %c0_i32, %c0_i32_0 : i32, i32
  }
  func.func @transform_10(%arg0: i32) -> (i32, i32) {
    %c0_i32 = arith.constant 0 : i32
    %c0_i32_0 = arith.constant 0 : i32
    %c0_i32_1 = arith.constant 0 : i32
    return %c0_i32, %c0_i32_0 : i32, i32
  }
  func.func @transform_11(%arg0: i32) -> (i32, i32) {
    %c0_i32 = arith.constant 0 : i32
    %c0_i32_0 = arith.constant 0 : i32
    %c0_i32_1 = arith.constant 0 : i32
    return %c0_i32, %c0_i32_0 : i32, i32
  }
  func.func @transform_12(%arg0: i32) -> (i32, i32) {
    %c0_i32 = arith.constant 0 : i32
    %c0_i32_0 = arith.constant 0 : i32
    %c0_i32_1 = arith.constant 0 : i32
    return %c0_i32, %c0_i32_0 : i32, i32
  }
  func.func @transform_13(%arg0: i32) -> (i32, i32) {
    %c0_i32 = arith.constant 0 : i32
    %c0_i32_0 = arith.constant 0 : i32
    %c0_i32_1 = arith.constant 0 : i32
    return %c0_i32, %c0_i32_0 : i32, i32
  }
  func.func @transform_14(%arg0: i32) -> (i32, i32) {
    %c0_i32 = arith.constant 0 : i32
    %c0_i32_0 = arith.constant 0 : i32
    %c0_i32_1 = arith.constant 0 : i32
    return %c0_i32, %c0_i32_0 : i32, i32
  }
  func.func @transform_15(%arg0: i32) -> (i32, i32) {
    %c0_i32 = arith.constant 0 : i32
    %c0_i32_0 = arith.constant 0 : i32
    %c0_i32_1 = arith.constant 0 : i32
    return %c0_i32, %c0_i32_0 : i32, i32
  }
  func.func @transform_16(%arg0: i32) -> (i32, i32) {
    %c0_i32 = arith.constant 0 : i32
    %c0_i32_0 = arith.constant 0 : i32
    %c0_i32_1 = arith.constant 0 : i32
    return %c0_i32, %c0_i32_0 : i32, i32
  }
  func.func @transform_17(%arg0: i32) -> (i32, i32) {
    %c0_i32 = arith.constant 0 : i32
    %c0_i32_0 = arith.constant 0 : i32
    %c0_i32_1 = arith.constant 0 : i32
    return %c0_i32, %c0_i32_0 : i32, i32
  }
  func.func @transform_18(%arg0: i32) -> (i32, i32) {
    %c0_i32 = arith.constant 0 : i32
    %c0_i32_0 = arith.constant 0 : i32
    %c0_i32_1 = arith.constant 0 : i32
    return %c0_i32, %c0_i32_0 : i32, i32
  }
  func.func @transform_19(%arg0: i32) -> (i32, i32) {
    %c0_i32 = arith.constant 0 : i32
    %c0_i32_0 = arith.constant 0 : i32
    %c0_i32_1 = arith.constant 0 : i32
    return %c0_i32, %c0_i32_0 : i32, i32
  }
  func.func @transform_20(%arg0: i32) -> (i32, i32, i32) {
    %c0_i32 = arith.constant 0 : i32
    %c0_i32_0 = arith.constant 0 : i32
    %c0_i32_1 = arith.constant 0 : i32
    return %c0_i32, %c0_i32_0, %arg0 : i32, i32, i32
  }
  func.func @transform_21(%arg0: i32) -> (i32, i32, i32) {
    %c0_i32 = arith.constant 0 : i32
    %c0_i32_0 = arith.constant 0 : i32
    %c0_i32_1 = arith.constant 0 : i32
    return %c0_i32, %c0_i32_0, %arg0 : i32, i32, i32
  }
}

</mosaic_0001>

<llo_original>
// kernel: tpu_custom_call.1
$region0: #{tpu_custom_call.1}
  #allocation0 [shape = 'u32[]', space=smem, size = 0x4, offset = 0x4, fixed_abs, tag = 'smem constant byte address 0x4 - core index']
  #allocation1 [shape = 'u32[144,128]{1,0:T(1,128)}', space=vmem, size = 0x12000, scoped, tag = 'internal scratch']
  %s0 = inlined_call_operand.vmem [shape: f32[1,16,128], index: 0, kind: input, shape index: {}]
  %s1 = inlined_call_operand.vmem [shape: f32[3,8,128], index: 1, kind: input, shape index: {}]
  %s2 = inlined_call_operand.vmem [shape: f32[16,1], index: 2, kind: input, shape index: {}]
  %s3 = inlined_call_operand.vmem [shape: f32[16,1], index: 3, kind: input, shape index: {}]
  %s4 = inlined_call_operand.vmem [shape: f32[16,16], index: 4, kind: input, shape index: {}]
  %s5 = inlined_call_operand.vmem [shape: f32[16,1], index: 5, kind: input, shape index: {}]
  %s6 = inlined_call_operand.vmem [shape: f32[16,1], index: 6, kind: input, shape index: {}]
  %s7 = inlined_call_operand.vmem [shape: f32[16,16], index: 7, kind: input, shape index: {}]
  %s8 = inlined_call_operand.vmem [shape: f32[16,1], index: 8, kind: input, shape index: {}]
  %s9 = inlined_call_operand.vmem [shape: f32[16,1], index: 9, kind: input, shape index: {}]
  %s10 = inlined_call_operand.vmem [shape: f32[4,16], index: 10, kind: input, shape index: {}]
  %s11 = inlined_call_operand.vmem [shape: f32[8,1], index: 11, kind: input, shape index: {}]
  %s12 = inlined_call_operand.vmem [shape: f32[8,1], index: 12, kind: input, shape index: {}]
  %s13 = inlined_call_operand.vmem [shape: f32[8,8], index: 13, kind: input, shape index: {}]
  %s14 = inlined_call_operand.vmem [shape: f32[8,1], index: 14, kind: input, shape index: {}]
  %s15 = inlined_call_operand.vmem [shape: f32[8,1], index: 15, kind: input, shape index: {}]
  %s16 = inlined_call_operand.vmem [shape: f32[8,8], index: 16, kind: input, shape index: {}]
  %s17 = inlined_call_operand.vmem [shape: f32[8,1], index: 17, kind: input, shape index: {}]
  %s18 = inlined_call_operand.vmem [shape: f32[8,1], index: 18, kind: input, shape index: {}]
  %s19 = inlined_call_operand.vmem [shape: f32[2,8], index: 19, kind: input, shape index: {}]
  %s20 = inlined_call_operand.hbm [shape: f32[1,4,128], index: 20, kind: output, shape index: {0}]
  %s21 = inlined_call_operand.hbm [shape: f32[3,2,128], index: 21, kind: output, shape index: {1}]
  %22 = xla_tuple %s20, %s21
  %s23 = sld [smem:[#allocation0]]
  $region98: #{tpu_custom_call.1} parent=0
    _
  %s25 = ssub.s32 1, %s23
  %s26 = scalar_select 0, %s25, %s23
  $region1: #{tpu_custom_call.1} parent=0
    #allocation2 [shape = 'u8[2048]{0}', space=vmem, size = 0x800, scoped, tag = 'output window, operand 0, single buffered']
    #allocation3 [shape = 's32[1]{0}', space=sflag, size = 0x4, scoped, tag = 'scoped memory for tpu_custom_call.1']
    #allocation4 [shape = 'u8[3072]{0}', space=vmem, size = 0xc00, scoped, tag = 'output window, operand 1, single buffered']
    #allocation5 [shape = 's32[1]{0}', space=sflag, size = 0x4, scoped, tag = 'scoped memory for tpu_custom_call.1']
    %27 = vsyncpa [#allocation3], 0
    %28 = vsyncpa [#allocation5], 0
    // Predicated region
    $region2: #{tpu_custom_call.1} parent=1 // pred_check
      _
    $region3: #{tpu_custom_call.1} parent=1 // pred_check_branch
      %30 = sbr.rel (0) target = $region5
    $region4: #{tpu_custom_call.1} parent=1 // pred_region
      _
    $region5: #{tpu_custom_call.1} parent=1 // pred_fallthru
      _
    // Predicated region
    $region6: #{tpu_custom_call.1} parent=1 // pred_check
      _
    $region7: #{tpu_custom_call.1} parent=1 // pred_check_branch
      %32 = sbr.rel (0) target = $region9
    $region8: #{tpu_custom_call.1} parent=1 // pred_region
      _
    $region9: #{tpu_custom_call.1} parent=1 // pred_fallthru
      _
    // Predicated region
    $region10: #{tpu_custom_call.1} parent=1 // pred_check
      _
    $region11: #{tpu_custom_call.1} parent=1 // pred_check_branch
      %34 = sbr.rel (0) target = $region13
    $region12: #{tpu_custom_call.1} parent=1 // pred_region
      _
    $region13: #{tpu_custom_call.1} parent=1 // pred_fallthru
      _
    // Predicated region
    $region14: #{tpu_custom_call.1} parent=1 // pred_check
      _
    $region15: #{tpu_custom_call.1} parent=1 // pred_check_branch
      %36 = sbr.rel (0) target = $region17
    $region16: #{tpu_custom_call.1} parent=1 // pred_region
      _
    $region17: #{tpu_custom_call.1} parent=1 // pred_fallthru
      _
    // Predicated region
    $region18: #{tpu_custom_call.1} parent=1 // pred_check
      _
    $region19: #{tpu_custom_call.1} parent=1 // pred_check_branch
      %38 = sbr.rel (0) target = $region21
    $region20: #{tpu_custom_call.1} parent=1 // pred_region
      _
    $region21: #{tpu_custom_call.1} parent=1 // pred_fallthru
      _
    // Predicated region
    $region22: #{tpu_custom_call.1} parent=1 // pred_check
      _
    $region23: #{tpu_custom_call.1} parent=1 // pred_check_branch
      %40 = sbr.rel (0) target = $region25
    $region24: #{tpu_custom_call.1} parent=1 // pred_region
      _
    $region25: #{tpu_custom_call.1} parent=1 // pred_fallthru
      _
    // Predicated region
    $region26: #{tpu_custom_call.1} parent=1 // pred_check
      _
    $region27: #{tpu_custom_call.1} parent=1 // pred_check_branch
      %42 = sbr.rel (0) target = $region29
    $region28: #{tpu_custom_call.1} parent=1 // pred_region
      _
    $region29: #{tpu_custom_call.1} parent=1 // pred_fallthru
      _
    // Predicated region
    $region30: #{tpu_custom_call.1} parent=1 // pred_check
      _
    $region31: #{tpu_custom_call.1} parent=1 // pred_check_branch
      %44 = sbr.rel (0) target = $region33
    $region32: #{tpu_custom_call.1} parent=1 // pred_region
      _
    $region33: #{tpu_custom_call.1} parent=1 // pred_fallthru
      _
    // Predicated region
    $region34: #{tpu_custom_call.1} parent=1 // pred_check
      _
    $region35: #{tpu_custom_call.1} parent=1 // pred_check_branch
      %46 = sbr.rel (0) target = $region37
    $region36: #{tpu_custom_call.1} parent=1 // pred_region
      _
    $region37: #{tpu_custom_call.1} parent=1 // pred_fallthru
      _
    // Predicated region
    $region38: #{tpu_custom_call.1} parent=1 // pred_check
      _
    $region39: #{tpu_custom_call.1} parent=1 // pred_check_branch
      %48 = sbr.rel (0) target = $region41
    $region40: #{tpu_custom_call.1} parent=1 // pred_region
      _
    $region41: #{tpu_custom_call.1} parent=1 // pred_fallthru
      _
    // Predicated region
    $region42: #{tpu_custom_call.1} parent=1 // pred_check
      _
    $region43: #{tpu_custom_call.1} parent=1 // pred_check_branch
      %50 = sbr.rel (0) target = $region45
    $region44: #{tpu_custom_call.1} parent=1 // pred_region
      _
    $region45: #{tpu_custom_call.1} parent=1 // pred_fallthru
      _
    // Predicated region
    $region46: #{tpu_custom_call.1} parent=1 // pred_check
      _
    $region47: #{tpu_custom_call.1} parent=1 // pred_check_branch
      %52 = sbr.rel (0) target = $region49
    $region48: #{tpu_custom_call.1} parent=1 // pred_region
      _
    $region49: #{tpu_custom_call.1} parent=1 // pred_fallthru
      _
    // Predicated region
    $region50: #{tpu_custom_call.1} parent=1 // pred_check
      _
    $region51: #{tpu_custom_call.1} parent=1 // pred_check_branch
      %54 = sbr.rel (0) target = $region53
    $region52: #{tpu_custom_call.1} parent=1 // pred_region
      _
    $region53: #{tpu_custom_call.1} parent=1 // pred_fallthru
      _
    // Predicated region
    $region54: #{tpu_custom_call.1} parent=1 // pred_check
      _
    $region55: #{tpu_custom_call.1} parent=1 // pred_check_branch
      %56 = sbr.rel (0) target = $region57
    $region56: #{tpu_custom_call.1} parent=1 // pred_region
      _
    $region57: #{tpu_custom_call.1} parent=1 // pred_fallthru
      _
    // Predicated region
    $region58: #{tpu_custom_call.1} parent=1 // pred_check
      _
    $region59: #{tpu_custom_call.1} parent=1 // pred_check_branch
      %58 = sbr.rel (0) target = $region61
    $region60: #{tpu_custom_call.1} parent=1 // pred_region
      _
    $region61: #{tpu_custom_call.1} parent=1 // pred_fallthru
      _
    // Predicated region
    $region62: #{tpu_custom_call.1} parent=1 // pred_check
      _
    $region63: #{tpu_custom_call.1} parent=1 // pred_check_branch
      %60 = sbr.rel (0) target = $region65
    $region64: #{tpu_custom_call.1} parent=1 // pred_region
      _
    $region65: #{tpu_custom_call.1} parent=1 // pred_fallthru
      _
    // Predicated region
    $region66: #{tpu_custom_call.1} parent=1 // pred_check
      _
    $region67: #{tpu_custom_call.1} parent=1 // pred_check_branch
      %62 = sbr.rel (0) target = $region69
    $region68: #{tpu_custom_call.1} parent=1 // pred_region
      _
    $region69: #{tpu_custom_call.1} parent=1 // pred_fallthru
      _
    // Predicated region
    $region70: #{tpu_custom_call.1} parent=1 // pred_check
      _
    $region71: #{tpu_custom_call.1} parent=1 // pred_check_branch
      %64 = sbr.rel (0) target = $region73
    $region72: #{tpu_custom_call.1} parent=1 // pred_region
      _
    $region73: #{tpu_custom_call.1} parent=1 // pred_fallthru
      _
    // Predicated region
    $region74: #{tpu_custom_call.1} parent=1 // pred_check
      _
    $region75: #{tpu_custom_call.1} parent=1 // pred_check_branch
      %66 = sbr.rel (0) target = $region77
    $region76: #{tpu_custom_call.1} parent=1 // pred_region
      _
    $region77: #{tpu_custom_call.1} parent=1 // pred_fallthru
      _
    // Predicated region
    $region78: #{tpu_custom_call.1} parent=1 // pred_check
      _
    $region79: #{tpu_custom_call.1} parent=1 // pred_check_branch
      %68 = sbr.rel (0) target = $region81
    $region80: #{tpu_custom_call.1} parent=1 // pred_region
      _
    $region81: #{tpu_custom_call.1} parent=1 // pred_fallthru
      _
    %v69 = vld [vmem:[%s0] sm:$0xff]
    %v70 = vld [vmem:[%s0 + $0x8] sm:$0xff]
    %v71 = vld [vmem:[%s2] sm:$0xff]
    %v72 = vld [vmem:[%s2 + $0x8] sm:$0xff]
    %v73 = vld [vmem:[%s3] sm:$0xff]
    %v74 = vld [vmem:[%s3 + $0x8] sm:$0xff]
    %v75 = vld [vmem:[%s4] sm:$0xff]
    %v76 = vld [vmem:[%s4 + $0x8] sm:$0xff]
    %v77 = vmul.f32 %v69, %v69
    %v78 = vmul.f32 %v70, %v70
    %v79 = vmax.f32 %v77, 1e-24
    %v80 = vmax.f32 %v78, 1e-24
    %v81 = vrsqrt.pop %v79
    %v82 = vrsqrt.pop %v80
    %v83 = vrsqrt.pop %v79
    %v84 = vmul.f32 %v79, %v83
    %vm85 = vcmp.eq.f32.partialorder %v79, inf
    %v86 = vsel %vm85, %v79, %v84
    %vm87 = vcmp.eq.f32.partialorder %v79, 0.0
    %v88 = vand.u32 %v79, 2147483648
    %v89 = vsel %vm87, %v88, %v86
    %v90 = vrsqrt.pop %v80
    %v91 = vmul.f32 %v80, %v90
    %vm92 = vcmp.eq.f32.partialorder %v80, inf
    %v93 = vsel %vm92, %v80, %v91
    %vm94 = vcmp.eq.f32.partialorder %v80, 0.0
    %v95 = vand.u32 %v80, 2147483648
    %v96 = vsel %vm94, %v95, %v93
    %v97 = vadd.f32 %v89, %v96
    %v98 = vrot.slane %v97, 4
    %v99 = vadd.f32 %v97, %v98
    %v100 = vrot.slane %v99, 2
    %v101 = vadd.f32 %v99, %v100
    %v102 = vrot.slane %v101, 1
    %v103 = vadd.f32 %v101, %v102
    %v104 = vrcp.pop 16.0
    %v105 = vmul.f32 %v103, %v104
    %v106 = vsub.f32 %v89, %v105
    %v107 = vsub.f32 %v96, %v105
    %v108 = vmul.f32 %v106, %v106
    %v109 = vmul.f32 %v107, %v107
    %v110 = vadd.f32 %v108, %v109
    %v111 = vrot.slane %v110, 4
    %v112 = vadd.f32 %v110, %v111
    %v113 = vrot.slane %v112, 2
    %v114 = vadd.f32 %v112, %v113
    %v115 = vrot.slane %v114, 1
    %v116 = vadd.f32 %v114, %v115
    %v117 = vmul.f32 %v116, %v104
    %v118 = vadd.f32 %v117, 1e-05
    %v119 = vrsqrt.pop %v118
    %v120 = vmul.f32 %v106, %v119
    %v121 = vmul.f32 %v107, %v119
    %123 = vset.pattern.permute.xlu0 0
    %124 = vperm.xlu0 %123, %v71
    %v125 = vpop.permute.xlu0 %124
    %128 = vset.pattern.permute.xlu0 0
    %129 = vperm.xlu0 %128, %v72
    %v130 = vpop.permute.xlu0 %129
    %v132 = vmul.f32 %v120, %v125
    %v133 = vmul.f32 %v121, %v130
    %135 = vset.pattern.permute.xlu0 0
    %136 = vperm.xlu0 %135, %v73
    %v137 = vpop.permute.xlu0 %136
    %140 = vset.pattern.permute.xlu0 0
    %141 = vperm.xlu0 %140, %v74
    %v142 = vpop.permute.xlu0 %141
    %v144 = vadd.f32 %v132, %v137
    %v145 = vadd.f32 %v133, %v142
    %vm146 = vcmp.gt.f32.partialorder %v144, 0.0
    %vm147 = vcmp.gt.f32.partialorder %v145, 0.0
    %v148 = vmin.f32 %v144, 0.0
    %v149 = vmin.f32 %v145, 0.0
    %v150 = vmul.f32 %v148, 1.442695
    %v151 = vpow.pop %v150
    %v152 = vmul.f32 %v149, 1.442695
    %v153 = vpow.pop %v152
    %v154 = vsub.f32 %v151, 1.0
    %v155 = vsub.f32 %v153, 1.0
    %v156 = vsel %vm146, %v144, %v154
    %v157 = vsel %vm147, %v145, %v155
    %v158 = vmul.f32 %v156, %v81
    %v159 = vmul.f32 %v157, %v82
    %v160 = vmul.f32 %v69, %v158
    %v161 = vmul.f32 %v70, %v159
    %vm162 = vcmask 130048
    %v164 = vsel %vm162, %v75, 0
    %v167 = vsel %vm162, %v76, 0
    %169 = vmatprep.subr.mxu0 0.0
    %170 = vmatpush1.msra.mxu0 %v160
    %171 = vmatprep.subr.mxu0 0.0
    %172 = vmatpush1.msra.mxu0 %v161
    %173 = vmatprep.subr.mxu0 0.0
    %174 = vmatpush1.msra.mxu0 0.0
    %175 = vmatprep.subr.mxu0 0.0
    %176 = vmatpush1.msra.mxu0 0.0
    %177 = vmatprep.subr.mxu0 0.0
    %178 = vmatpush1.msra.mxu0 0.0
    %179 = vmatprep.subr.mxu0 0.0
    %180 = vmatpush1.msra.mxu0 0.0
    %181 = vmatprep.subr.mxu0 0.0
    %182 = vmatpush1.msra.mxu0 0.0
    %183 = vmatprep.subr.mxu0 0.0
    %184 = vmatpush1.msra.mxu0 0.0
    %185 = vmatprep.subr.mxu0 0.0
    %186 = vmatpush1.msra.mxu0 0.0
    %187 = vmatprep.subr.mxu0 0.0
    %188 = vmatpush1.msra.mxu0 0.0
    %189 = vmatprep.subr.mxu0 0.0
    %190 = vmatpush1.msra.mxu0 0.0
    %191 = vmatprep.subr.mxu0 0.0
    %192 = vmatpush1.msra.mxu0 0.0
    %193 = vmatprep.subr.mxu0 0.0
    %194 = vmatpush1.msra.mxu0 0.0
    %195 = vmatprep.subr.mxu0 0.0
    %196 = vmatpush1.msra.mxu0 0.0
    %197 = vmatprep.subr.mxu0 0.0
    %198 = vmatpush1.msra.mxu0 0.0
    %199 = vmatprep.subr.mxu0 0.0
    %200 = vmatpush1.msra.mxu0 0.0
    %201 = vmatprep.subr.mxu0 0.0
    %202 = vmatpush1.msra.mxu0 0.0
    %203 = vmatprep.subr.mxu0 0.0
    %204 = vmatpush1.msra.mxu0 0.0
    %205 = vmatprep.subr.mxu0 0.0
    %206 = vmatpush1.msra.mxu0 0.0
    %207 = vmatprep.subr.mxu0 0.0
    %208 = vmatpush1.msra.mxu0 0.0
    %209 = vmatprep.subr.mxu0 0.0
    %210 = vmatpush1.msra.mxu0 0.0
    %211 = vmatprep.subr.mxu0 0.0
    %212 = vmatpush1.msra.mxu0 0.0
    %213 = vmatprep.subr.mxu0 0.0
    %214 = vmatpush1.msra.mxu0 0.0
    %215 = vmatprep.subr.mxu0 0.0
    %216 = vmatpush1.msra.mxu0 0.0
    %217 = vmatprep.subr.mxu0 0.0
    %218 = vmatpush1.msra.mxu0 0.0
    %219 = vmatprep.subr.mxu0 0.0
    %220 = vmatpush1.msra.mxu0 0.0
    %221 = vmatprep.subr.mxu0 0.0
    %222 = vmatpush1.msra.mxu0 0.0
    %223 = vmatprep.subr.mxu0 0.0
    %224 = vmatpush1.msra.mxu0 0.0
    %225 = vmatprep.subr.mxu0 0.0
    %226 = vmatpush1.msra.mxu0 0.0
    %227 = vmatprep.subr.mxu0 0.0
    %228 = vmatpush1.msra.mxu0 0.0
    %229 = vmatprep.subr.mxu0 0.0
    %230 = vmatpush1.msra.mxu0 0.0
    %231 = vmatprep.subr.mxu0 0.0
    %232 = vmatpush1.msra.mxu0 0.0
    %233 = vmatprep.mubr.f32.mxu0 0.0
    %234 = vmatmul.mubr.f32.gmra.mrb[0].mxu0 %v164
    %v235 = vpop.f32.mrb[0].mxu0
    %v236 = vadd.f32 0.0, %v235
    %v237 = vpop.f32.mrb[0].mxu0
    %238 = vmatprep.mubr.f32.mxu0 0.0
    %239 = vmatmul.mubr.f32.gmra.mrb[0].mxu0 %v167
    %v240 = vpop.f32.mrb[0].mxu0
    %v241 = vadd.f32 0.0, %v240
    %v242 = vpop.f32.mrb[0].mxu0
    %243 = vdwg.mxu0
    %v244 = vld [vmem:[%s5] sm:$0xff]
    %v245 = vld [vmem:[%s5 + $0x8] sm:$0xff]
    %v246 = vld [vmem:[%s6] sm:$0xff]
    %v247 = vld [vmem:[%s6 + $0x8] sm:$0xff]
    %v248 = vld [vmem:[%s7] sm:$0xff]
    %v249 = vld [vmem:[%s7 + $0x8] sm:$0xff]
    %v250 = vmul.f32 %v236, %v236
    %v251 = vmul.f32 %v241, %v241
    %v252 = vmax.f32 %v250, 1e-24
    %v253 = vmax.f32 %v251, 1e-24
    %v254 = vrsqrt.pop %v252
    %v255 = vrsqrt.pop %v253
    %v256 = vrsqrt.pop %v252
    %v257 = vmul.f32 %v252, %v256
    %vm258 = vcmp.eq.f32.partialorder %v252, inf
    %v259 = vsel %vm258, %v252, %v257
    %vm260 = vcmp.eq.f32.partialorder %v252, 0.0
    %v261 = vand.u32 %v252, 2147483648
    %v262 = vsel %vm260, %v261, %v259
    %v263 = vrsqrt.pop %v253
    %v264 = vmul.f32 %v253, %v263
    %vm265 = vcmp.eq.f32.partialorder %v253, inf
    %v266 = vsel %vm265, %v253, %v264
    %vm267 = vcmp.eq.f32.partialorder %v253, 0.0
    %v268 = vand.u32 %v253, 2147483648
    %v269 = vsel %vm267, %v268, %v266
    %v270 = vadd.f32 %v262, %v269
    %v271 = vrot.slane %v270, 4
    %v272 = vadd.f32 %v270, %v271
    %v273 = vrot.slane %v272, 2
    %v274 = vadd.f32 %v272, %v273
    %v275 = vrot.slane %v274, 1
    %v276 = vadd.f32 %v274, %v275
    %v277 = vmul.f32 %v276, %v104
    %v278 = vsub.f32 %v262, %v277
    %v279 = vsub.f32 %v269, %v277
    %v280 = vmul.f32 %v278, %v278
    %v281 = vmul.f32 %v279, %v279
    %v282 = vadd.f32 %v280, %v281
    %v283 = vrot.slane %v282, 4
    %v284 = vadd.f32 %v282, %v283
    %v285 = vrot.slane %v284, 2
    %v286 = vadd.f32 %v284, %v285
    %v287 = vrot.slane %v286, 1
    %v288 = vadd.f32 %v286, %v287
    %v289 = vmul.f32 %v288, %v104
    %v290 = vadd.f32 %v289, 1e-05
    %v291 = vrsqrt.pop %v290
    %v292 = vmul.f32 %v278, %v291
    %v293 = vmul.f32 %v279, %v291
    %295 = vset.pattern.permute.xlu0 0
    %296 = vperm.xlu0 %295, %v244
    %v297 = vpop.permute.xlu0 %296
    %300 = vset.pattern.permute.xlu0 0
    %301 = vperm.xlu0 %300, %v245
    %v302 = vpop.permute.xlu0 %301
    %v304 = vmul.f32 %v292, %v297
    %v305 = vmul.f32 %v293, %v302
    %307 = vset.pattern.permute.xlu0 0
    %308 = vperm.xlu0 %307, %v246
    %v309 = vpop.permute.xlu0 %308
    %312 = vset.pattern.permute.xlu0 0
    %313 = vperm.xlu0 %312, %v247
    %v314 = vpop.permute.xlu0 %313
    %v316 = vadd.f32 %v304, %v309
    %v317 = vadd.f32 %v305, %v314
    %vm318 = vcmp.gt.f32.partialorder %v316, 0.0
    %vm319 = vcmp.gt.f32.partialorder %v317, 0.0
    %v320 = vmin.f32 %v316, 0.0
    %v321 = vmin.f32 %v317, 0.0
    %v322 = vmul.f32 %v320, 1.442695
    %v323 = vpow.pop %v322
    %v324 = vmul.f32 %v321, 1.442695
    %v325 = vpow.pop %v324
    %v326 = vsub.f32 %v323, 1.0
    %v327 = vsub.f32 %v325, 1.0
    %v328 = vsel %vm318, %v316, %v326
    %v329 = vsel %vm319, %v317, %v327
    %v330 = vmul.f32 %v328, %v254
    %v331 = vmul.f32 %v329, %v255
    %v332 = vmul.f32 %v236, %v330
    %v333 = vmul.f32 %v241, %v331
    %v335 = vsel %vm162, %v248, 0
    %v338 = vsel %vm162, %v249, 0
    %340 = vmatprep.subr.mxu0 0.0
    %341 = vmatpush1.msra.mxu0 %v332
    %342 = vmatprep.subr.mxu0 0.0
    %343 = vmatpush1.msra.mxu0 %v333
    %344 = vmatprep.subr.mxu0 0.0
    %345 = vmatpush1.msra.mxu0 0.0
    %346 = vmatprep.subr.mxu0 0.0
    %347 = vmatpush1.msra.mxu0 0.0
    %348 = vmatprep.subr.mxu0 0.0
    %349 = vmatpush1.msra.mxu0 0.0
    %350 = vmatprep.subr.mxu0 0.0
    %351 = vmatpush1.msra.mxu0 0.0
    %352 = vmatprep.subr.mxu0 0.0
    %353 = vmatpush1.msra.mxu0 0.0
    %354 = vmatprep.subr.mxu0 0.0
    %355 = vmatpush1.msra.mxu0 0.0
    %356 = vmatprep.subr.mxu0 0.0
    %357 = vmatpush1.msra.mxu0 0.0
    %358 = vmatprep.subr.mxu0 0.0
    %359 = vmatpush1.msra.mxu0 0.0
    %360 = vmatprep.subr.mxu0 0.0
    %361 = vmatpush1.msra.mxu0 0.0
    %362 = vmatprep.subr.mxu0 0.0
    %363 = vmatpush1.msra.mxu0 0.0
    %364 = vmatprep.subr.mxu0 0.0
    %365 = vmatpush1.msra.mxu0 0.0
    %366 = vmatprep.subr.mxu0 0.0
    %367 = vmatpush1.msra.mxu0 0.0
    %368 = vmatprep.subr.mxu0 0.0
    %369 = vmatpush1.msra.mxu0 0.0
    %370 = vmatprep.subr.mxu0 0.0
    %371 = vmatpush1.msra.mxu0 0.0
    %372 = vmatprep.subr.mxu0 0.0
    %373 = vmatpush1.msra.mxu0 0.0
    %374 = vmatprep.subr.mxu0 0.0
    %375 = vmatpush1.msra.mxu0 0.0
    %376 = vmatprep.subr.mxu0 0.0
    %377 = vmatpush1.msra.mxu0 0.0
    %378 = vmatprep.subr.mxu0 0.0
    %379 = vmatpush1.msra.mxu0 0.0
    %380 = vmatprep.subr.mxu0 0.0
    %381 = vmatpush1.msra.mxu0 0.0
    %382 = vmatprep.subr.mxu0 0.0
    %383 = vmatpush1.msra.mxu0 0.0
    %384 = vmatprep.subr.mxu0 0.0
    %385 = vmatpush1.msra.mxu0 0.0
    %386 = vmatprep.subr.mxu0 0.0
    %387 = vmatpush1.msra.mxu0 0.0
    %388 = vmatprep.subr.mxu0 0.0
    %389 = vmatpush1.msra.mxu0 0.0
    %390 = vmatprep.subr.mxu0 0.0
    %391 = vmatpush1.msra.mxu0 0.0
    %392 = vmatprep.subr.mxu0 0.0
    %393 = vmatpush1.msra.mxu0 0.0
    %394 = vmatprep.subr.mxu0 0.0
    %395 = vmatpush1.msra.mxu0 0.0
    %396 = vmatprep.subr.mxu0 0.0
    %397 = vmatpush1.msra.mxu0 0.0
    %398 = vmatprep.subr.mxu0 0.0
    %399 = vmatpush1.msra.mxu0 0.0
    %400 = vmatprep.subr.mxu0 0.0
    %401 = vmatpush1.msra.mxu0 0.0
    %402 = vmatprep.subr.mxu0 0.0
    %403 = vmatpush1.msra.mxu0 0.0
    %404 = vmatprep.mubr.f32.mxu0 0.0
    %405 = vmatmul.mubr.f32.gmra.mrb[0].mxu0 %v335
    %v406 = vpop.f32.mrb[0].mxu0
    %v407 = vadd.f32 0.0, %v406
    %v408 = vpop.f32.mrb[0].mxu0
    %409 = vmatprep.mubr.f32.mxu0 0.0
    %410 = vmatmul.mubr.f32.gmra.mrb[0].mxu0 %v338
    %v411 = vpop.f32.mrb[0].mxu0
    %v412 = vadd.f32 0.0, %v411
    %v413 = vpop.f32.mrb[0].mxu0
    %414 = vdwg.mxu0
    %v415 = vld [vmem:[%s8] sm:$0xff]
    %v416 = vld [vmem:[%s8 + $0x8] sm:$0xff]
    %v417 = vld [vmem:[%s9] sm:$0xff]
    %v418 = vld [vmem:[%s9 + $0x8] sm:$0xff]
    %v419 = vld [vmem:[%s10] sm:$0xf]
    %v420 = vmul.f32 %v407, %v407
    %v421 = vmul.f32 %v412, %v412
    %v422 = vmax.f32 %v420, 1e-24
    %v423 = vmax.f32 %v421, 1e-24
    %v424 = vrsqrt.pop %v422
    %v425 = vrsqrt.pop %v423
    %v426 = vrsqrt.pop %v422
    %v427 = vmul.f32 %v422, %v426
    %vm428 = vcmp.eq.f32.partialorder %v422, inf
    %v429 = vsel %vm428, %v422, %v427
    %vm430 = vcmp.eq.f32.partialorder %v422, 0.0
    %v431 = vand.u32 %v422, 2147483648
    %v432 = vsel %vm430, %v431, %v429
    %v433 = vrsqrt.pop %v423
    %v434 = vmul.f32 %v423, %v433
    %vm435 = vcmp.eq.f32.partialorder %v423, inf
    %v436 = vsel %vm435, %v423, %v434
    %vm437 = vcmp.eq.f32.partialorder %v423, 0.0
    %v438 = vand.u32 %v423, 2147483648
    %v439 = vsel %vm437, %v438, %v436
    %v440 = vadd.f32 %v432, %v439
    %v441 = vrot.slane %v440, 4
    %v442 = vadd.f32 %v440, %v441
    %v443 = vrot.slane %v442, 2
    %v444 = vadd.f32 %v442, %v443
    %v445 = vrot.slane %v444, 1
    %v446 = vadd.f32 %v444, %v445
    %v447 = vmul.f32 %v446, %v104
    %v448 = vsub.f32 %v432, %v447
    %v449 = vsub.f32 %v439, %v447
    %v450 = vmul.f32 %v448, %v448
    %v451 = vmul.f32 %v449, %v449
    %v452 = vadd.f32 %v450, %v451
    %v453 = vrot.slane %v452, 4
    %v454 = vadd.f32 %v452, %v453
    %v455 = vrot.slane %v454, 2
    %v456 = vadd.f32 %v454, %v455
    %v457 = vrot.slane %v456, 1
    %v458 = vadd.f32 %v456, %v457
    %v459 = vmul.f32 %v458, %v104
    %v460 = vadd.f32 %v459, 1e-05
    %v461 = vrsqrt.pop %v460
    %v462 = vmul.f32 %v448, %v461
    %v463 = vmul.f32 %v449, %v461
    %465 = vset.pattern.permute.xlu0 0
    %466 = vperm.xlu0 %465, %v415
    %v467 = vpop.permute.xlu0 %466
    %470 = vset.pattern.permute.xlu0 0
    %471 = vperm.xlu0 %470, %v416
    %v472 = vpop.permute.xlu0 %471
    %v474 = vmul.f32 %v462, %v467
    %v475 = vmul.f32 %v463, %v472
    %477 = vset.pattern.permute.xlu0 0
    %478 = vperm.xlu0 %477, %v417
    %v479 = vpop.permute.xlu0 %478
    %482 = vset.pattern.permute.xlu0 0
    %483 = vperm.xlu0 %482, %v418
    %v484 = vpop.permute.xlu0 %483
    %v486 = vadd.f32 %v474, %v479
    %v487 = vadd.f32 %v475, %v484
    %vm488 = vcmp.gt.f32.partialorder %v486, 0.0
    %vm489 = vcmp.gt.f32.partialorder %v487, 0.0
    %v490 = vmin.f32 %v486, 0.0
    %v491 = vmin.f32 %v487, 0.0
    %v492 = vmul.f32 %v490, 1.442695
    %v493 = vpow.pop %v492
    %v494 = vmul.f32 %v491, 1.442695
    %v495 = vpow.pop %v494
    %v496 = vsub.f32 %v493, 1.0
    %v497 = vsub.f32 %v495, 1.0
    %v498 = vsel %vm488, %v486, %v496
    %v499 = vsel %vm489, %v487, %v497
    %v500 = vmul.f32 %v498, %v424
    %v501 = vmul.f32 %v499, %v425
    %v502 = vmul.f32 %v407, %v500
    %v503 = vmul.f32 %v412, %v501
    %v505 = vsel %vm162, %v419, 0
    %507 = vmatprep.subr.mxu0 0.0
    %508 = vmatpush1.msra.mxu0 %v502
    %509 = vmatprep.subr.mxu0 0.0
    %510 = vmatpush1.msra.mxu0 %v503
    %511 = vmatprep.subr.mxu0 0.0
    %512 = vmatpush1.msra.mxu0 0.0
    %513 = vmatprep.subr.mxu0 0.0
    %514 = vmatpush1.msra.mxu0 0.0
    %515 = vmatprep.subr.mxu0 0.0
    %516 = vmatpush1.msra.mxu0 0.0
    %517 = vmatprep.subr.mxu0 0.0
    %518 = vmatpush1.msra.mxu0 0.0
    %519 = vmatprep.subr.mxu0 0.0
    %520 = vmatpush1.msra.mxu0 0.0
    %521 = vmatprep.subr.mxu0 0.0
    %522 = vmatpush1.msra.mxu0 0.0
    %523 = vmatprep.subr.mxu0 0.0
    %524 = vmatpush1.msra.mxu0 0.0
    %525 = vmatprep.subr.mxu0 0.0
    %526 = vmatpush1.msra.mxu0 0.0
    %527 = vmatprep.subr.mxu0 0.0
    %528 = vmatpush1.msra.mxu0 0.0
    %529 = vmatprep.subr.mxu0 0.0
    %530 = vmatpush1.msra.mxu0 0.0
    %531 = vmatprep.subr.mxu0 0.0
    %532 = vmatpush1.msra.mxu0 0.0
    %533 = vmatprep.subr.mxu0 0.0
    %534 = vmatpush1.msra.mxu0 0.0
    %535 = vmatprep.subr.mxu0 0.0
    %536 = vmatpush1.msra.mxu0 0.0
    %537 = vmatprep.subr.mxu0 0.0
    %538 = vmatpush1.msra.mxu0 0.0
    %539 = vmatprep.subr.mxu0 0.0
    %540 = vmatpush1.msra.mxu0 0.0
    %541 = vmatprep.subr.mxu0 0.0
    %542 = vmatpush1.msra.mxu0 0.0
    %543 = vmatprep.subr.mxu0 0.0
    %544 = vmatpush1.msra.mxu0 0.0
    %545 = vmatprep.subr.mxu0 0.0
    %546 = vmatpush1.msra.mxu0 0.0
    %547 = vmatprep.subr.mxu0 0.0
    %548 = vmatpush1.msra.mxu0 0.0
    %549 = vmatprep.subr.mxu0 0.0
    %550 = vmatpush1.msra.mxu0 0.0
    %551 = vmatprep.subr.mxu0 0.0
    %552 = vmatpush1.msra.mxu0 0.0
    %553 = vmatprep.subr.mxu0 0.0
    %554 = vmatpush1.msra.mxu0 0.0
    %555 = vmatprep.subr.mxu0 0.0
    %556 = vmatpush1.msra.mxu0 0.0
    %557 = vmatprep.subr.mxu0 0.0
    %558 = vmatpush1.msra.mxu0 0.0
    %559 = vmatprep.subr.mxu0 0.0
    %560 = vmatpush1.msra.mxu0 0.0
    %561 = vmatprep.subr.mxu0 0.0
    %562 = vmatpush1.msra.mxu0 0.0
    %563 = vmatprep.subr.mxu0 0.0
    %564 = vmatpush1.msra.mxu0 0.0
    %565 = vmatprep.subr.mxu0 0.0
    %566 = vmatpush1.msra.mxu0 0.0
    %567 = vmatprep.subr.mxu0 0.0
    %568 = vmatpush1.msra.mxu0 0.0
    %569 = vmatprep.subr.mxu0 0.0
    %570 = vmatpush1.msra.mxu0 0.0
    %571 = vmatprep.mubr.f32.mxu0 0.0
    %572 = vmatmul.mubr.f32.gmra.mrb[0].mxu0 %v505
    %v573 = vpop.f32.mrb[0].mxu0
    %v574 = vadd.f32 0.0, %v573
    %v575 = vpop.f32.mrb[0].mxu0
    %576 = vdwg.mxu0
    %577 = vst [vmem:[#allocation2] sm:$0xf] %v574
    %v578 = vld [vmem:[%s1] sm:$0xff]
    %s579 = scalar_lea.vmem %s1, 8
    %v580 = vld [vmem:[%s579] sm:$0xff]
    %s581 = scalar_lea.vmem %s1, 16
    %v582 = vld [vmem:[%s581] sm:$0xff]
    %v583 = vld [vmem:[%s11] sm:$0xff]
    %v584 = vld [vmem:[%s12] sm:$0xff]
    %v585 = vld [vmem:[%s13] sm:$0xff]
    %v586 = vmul.f32 %v578, %v578
    %v587 = vmul.f32 %v580, %v580
    %v588 = vadd.f32 %v586, %v587
    %v589 = vmul.f32 %v582, %v582
    %v590 = vadd.f32 %v588, %v589
    %v591 = vmax.f32 %v590, 1e-24
    %v592 = vrsqrt.pop %v591
    %v593 = vrsqrt.pop %v591
    %v594 = vmul.f32 %v591, %v593
    %vm595 = vcmp.eq.f32.partialorder %v591, inf
    %v596 = vsel %vm595, %v591, %v594
    %vm597 = vcmp.eq.f32.partialorder %v591, 0.0
    %v598 = vand.u32 %v591, 2147483648
    %v599 = vsel %vm597, %v598, %v596
    %v600 = vrot.slane %v599, 4
    %v601 = vadd.f32 %v599, %v600
    %v602 = vrot.slane %v601, 2
    %v603 = vadd.f32 %v601, %v602
    %v604 = vrot.slane %v603, 1
    %v605 = vadd.f32 %v603, %v604
    %v606 = vrcp.pop 8.0
    %v607 = vmul.f32 %v605, %v606
    %v608 = vsub.f32 %v599, %v607
    %v609 = vmul.f32 %v608, %v608
    %v610 = vrot.slane %v609, 4
    %v611 = vadd.f32 %v609, %v610
    %v612 = vrot.slane %v611, 2
    %v613 = vadd.f32 %v611, %v612
    %v614 = vrot.slane %v613, 1
    %v615 = vadd.f32 %v613, %v614
    %v616 = vmul.f32 %v615, %v606
    %v617 = vadd.f32 %v616, 1e-05
    %v618 = vrsqrt.pop %v617
    %v619 = vmul.f32 %v608, %v618
    %621 = vset.pattern.permute.xlu0 0
    %622 = vperm.xlu0 %621, %v583
    %v623 = vpop.permute.xlu0 %622
    %v625 = vmul.f32 %v619, %v623
    %627 = vset.pattern.permute.xlu0 0
    %628 = vperm.xlu0 %627, %v584
    %v629 = vpop.permute.xlu0 %628
    %v631 = vadd.f32 %v625, %v629
    %vm632 = vcmp.gt.f32.partialorder %v631, 0.0
    %v633 = vmin.f32 %v631, 0.0
    %v634 = vmul.f32 %v633, 1.442695
    %v635 = vpow.pop %v634
    %v636 = vsub.f32 %v635, 1.0
    %v637 = vsel %vm632, %v631, %v636
    %v638 = vmul.f32 %v637, %v592
    %v639 = vmul.f32 %v578, %v638
    %vm640 = vcmask 64512
    %v642 = vsel %vm640, %v585, 0
    %644 = vmatprep.subr.mxu0 0.0
    %645 = vmatpush1.msra.mxu0 %v639
    %646 = vmatprep.subr.mxu0 0.0
    %647 = vmatpush1.msra.mxu0 0.0
    %648 = vmatprep.subr.mxu0 0.0
    %649 = vmatpush1.msra.mxu0 0.0
    %650 = vmatprep.subr.mxu0 0.0
    %651 = vmatpush1.msra.mxu0 0.0
    %652 = vmatprep.subr.mxu0 0.0
    %653 = vmatpush1.msra.mxu0 0.0
    %654 = vmatprep.subr.mxu0 0.0
    %655 = vmatpush1.msra.mxu0 0.0
    %656 = vmatprep.subr.mxu0 0.0
    %657 = vmatpush1.msra.mxu0 0.0
    %658 = vmatprep.subr.mxu0 0.0
    %659 = vmatpush1.msra.mxu0 0.0
    %660 = vmatprep.subr.mxu0 0.0
    %661 = vmatpush1.msra.mxu0 0.0
    %662 = vmatprep.subr.mxu0 0.0
    %663 = vmatpush1.msra.mxu0 0.0
    %664 = vmatprep.subr.mxu0 0.0
    %665 = vmatpush1.msra.mxu0 0.0
    %666 = vmatprep.subr.mxu0 0.0
    %667 = vmatpush1.msra.mxu0 0.0
    %668 = vmatprep.subr.mxu0 0.0
    %669 = vmatpush1.msra.mxu0 0.0
    %670 = vmatprep.subr.mxu0 0.0
    %671 = vmatpush1.msra.mxu0 0.0
    %672 = vmatprep.subr.mxu0 0.0
    %673 = vmatpush1.msra.mxu0 0.0
    %674 = vmatprep.subr.mxu0 0.0
    %675 = vmatpush1.msra.mxu0 0.0
    %676 = vmatprep.subr.mxu0 0.0
    %677 = vmatpush1.msra.mxu0 0.0
    %678 = vmatprep.subr.mxu0 0.0
    %679 = vmatpush1.msra.mxu0 0.0
    %680 = vmatprep.subr.mxu0 0.0
    %681 = vmatpush1.msra.mxu0 0.0
    %682 = vmatprep.subr.mxu0 0.0
    %683 = vmatpush1.msra.mxu0 0.0
    %684 = vmatprep.subr.mxu0 0.0
    %685 = vmatpush1.msra.mxu0 0.0
    %686 = vmatprep.subr.mxu0 0.0
    %687 = vmatpush1.msra.mxu0 0.0
    %688 = vmatprep.subr.mxu0 0.0
    %689 = vmatpush1.msra.mxu0 0.0
    %690 = vmatprep.subr.mxu0 0.0
    %691 = vmatpush1.msra.mxu0 0.0
    %692 = vmatprep.subr.mxu0 0.0
    %693 = vmatpush1.msra.mxu0 0.0
    %694 = vmatprep.subr.mxu0 0.0
    %695 = vmatpush1.msra.mxu0 0.0
    %696 = vmatprep.subr.mxu0 0.0
    %697 = vmatpush1.msra.mxu0 0.0
    %698 = vmatprep.subr.mxu0 0.0
    %699 = vmatpush1.msra.mxu0 0.0
    %700 = vmatprep.subr.mxu0 0.0
    %701 = vmatpush1.msra.mxu0 0.0
    %702 = vmatprep.subr.mxu0 0.0
    %703 = vmatpush1.msra.mxu0 0.0
    %704 = vmatprep.subr.mxu0 0.0
    %705 = vmatpush1.msra.mxu0 0.0
    %706 = vmatprep.subr.mxu0 0.0
    %707 = vmatpush1.msra.mxu0 0.0
    %708 = vmatprep.mubr.f32.mxu0 0.0
    %709 = vmatmul.mubr.f32.gmra.mrb[0].mxu0 %v642
    %v710 = vpop.f32.mrb[0].mxu0
    %v711 = vadd.f32 0.0, %v710
    %v712 = vpop.f32.mrb[0].mxu0
    %713 = vdwg.mxu0
    %v714 = vmul.f32 %v580, %v638
    %715 = vmatprep.subr.mxu0 0.0
    %716 = vmatpush1.msra.mxu0 %v714
    %717 = vmatprep.subr.mxu0 0.0
    %718 = vmatpush1.msra.mxu0 0.0
    %719 = vmatprep.subr.mxu0 0.0
    %720 = vmatpush1.msra.mxu0 0.0
    %721 = vmatprep.subr.mxu0 0.0
    %722 = vmatpush1.msra.mxu0 0.0
    %723 = vmatprep.subr.mxu0 0.0
    %724 = vmatpush1.msra.mxu0 0.0
    %725 = vmatprep.subr.mxu0 0.0
    %726 = vmatpush1.msra.mxu0 0.0
    %727 = vmatprep.subr.mxu0 0.0
    %728 = vmatpush1.msra.mxu0 0.0
    %729 = vmatprep.subr.mxu0 0.0
    %730 = vmatpush1.msra.mxu0 0.0
    %731 = vmatprep.subr.mxu0 0.0
    %732 = vmatpush1.msra.mxu0 0.0
    %733 = vmatprep.subr.mxu0 0.0
    %734 = vmatpush1.msra.mxu0 0.0
    %735 = vmatprep.subr.mxu0 0.0
    %736 = vmatpush1.msra.mxu0 0.0
    %737 = vmatprep.subr.mxu0 0.0
    %738 = vmatpush1.msra.mxu0 0.0
    %739 = vmatprep.subr.mxu0 0.0
    %740 = vmatpush1.msra.mxu0 0.0
    %741 = vmatprep.subr.mxu0 0.0
    %742 = vmatpush1.msra.mxu0 0.0
    %743 = vmatprep.subr.mxu0 0.0
    %744 = vmatpush1.msra.mxu0 0.0
    %745 = vmatprep.subr.mxu0 0.0
    %746 = vmatpush1.msra.mxu0 0.0
    %747 = vmatprep.subr.mxu0 0.0
    %748 = vmatpush1.msra.mxu0 0.0
    %749 = vmatprep.subr.mxu0 0.0
    %750 = vmatpush1.msra.mxu0 0.0
    %751 = vmatprep.subr.mxu0 0.0
    %752 = vmatpush1.msra.mxu0 0.0
    %753 = vmatprep.subr.mxu0 0.0
    %754 = vmatpush1.msra.mxu0 0.0
    %755 = vmatprep.subr.mxu0 0.0
    %756 = vmatpush1.msra.mxu0 0.0
    %757 = vmatprep.subr.mxu0 0.0
    %758 = vmatpush1.msra.mxu0 0.0
    %759 = vmatprep.subr.mxu0 0.0
    %760 = vmatpush1.msra.mxu0 0.0
    %761 = vmatprep.subr.mxu0 0.0
    %762 = vmatpush1.msra.mxu0 0.0
    %763 = vmatprep.subr.mxu0 0.0
    %764 = vmatpush1.msra.mxu0 0.0
    %765 = vmatprep.subr.mxu0 0.0
    %766 = vmatpush1.msra.mxu0 0.0
    %767 = vmatprep.subr.mxu0 0.0
    %768 = vmatpush1.msra.mxu0 0.0
    %769 = vmatprep.subr.mxu0 0.0
    %770 = vmatpush1.msra.mxu0 0.0
    %771 = vmatprep.subr.mxu0 0.0
    %772 = vmatpush1.msra.mxu0 0.0
    %773 = vmatprep.subr.mxu0 0.0
    %774 = vmatpush1.msra.mxu0 0.0
    %775 = vmatprep.subr.mxu0 0.0
    %776 = vmatpush1.msra.mxu0 0.0
    %777 = vmatprep.subr.mxu0 0.0
    %778 = vmatpush1.msra.mxu0 0.0
    %779 = vmatprep.mubr.f32.mxu0 0.0
    %780 = vmatmul.mubr.f32.gmra.mrb[0].mxu0 %v642
    %v781 = vpop.f32.mrb[0].mxu0
    %v782 = vadd.f32 0.0, %v781
    %v783 = vpop.f32.mrb[0].mxu0
    %784 = vdwg.mxu0
    %v785 = vmul.f32 %v582, %v638
    %786 = vmatprep.subr.mxu0 0.0
    %787 = vmatpush1.msra.mxu0 %v785
    %788 = vmatprep.subr.mxu0 0.0
    %789 = vmatpush1.msra.mxu0 0.0
    %790 = vmatprep.subr.mxu0 0.0
    %791 = vmatpush1.msra.mxu0 0.0
    %792 = vmatprep.subr.mxu0 0.0
    %793 = vmatpush1.msra.mxu0 0.0
    %794 = vmatprep.subr.mxu0 0.0
    %795 = vmatpush1.msra.mxu0 0.0
    %796 = vmatprep.subr.mxu0 0.0
    %797 = vmatpush1.msra.mxu0 0.0
    %798 = vmatprep.subr.mxu0 0.0
    %799 = vmatpush1.msra.mxu0 0.0
    %800 = vmatprep.subr.mxu0 0.0
    %801 = vmatpush1.msra.mxu0 0.0
    %802 = vmatprep.subr.mxu0 0.0
    %803 = vmatpush1.msra.mxu0 0.0
    %804 = vmatprep.subr.mxu0 0.0
    %805 = vmatpush1.msra.mxu0 0.0
    %806 = vmatprep.subr.mxu0 0.0
    %807 = vmatpush1.msra.mxu0 0.0
    %808 = vmatprep.subr.mxu0 0.0
    %809 = vmatpush1.msra.mxu0 0.0
    %810 = vmatprep.subr.mxu0 0.0
    %811 = vmatpush1.msra.mxu0 0.0
    %812 = vmatprep.subr.mxu0 0.0
    %813 = vmatpush1.msra.mxu0 0.0
    %814 = vmatprep.subr.mxu0 0.0
    %815 = vmatpush1.msra.mxu0 0.0
    %816 = vmatprep.subr.mxu0 0.0
    %817 = vmatpush1.msra.mxu0 0.0
    %818 = vmatprep.subr.mxu0 0.0
    %819 = vmatpush1.msra.mxu0 0.0
    %820 = vmatprep.subr.mxu0 0.0
    %821 = vmatpush1.msra.mxu0 0.0
    %822 = vmatprep.subr.mxu0 0.0
    %823 = vmatpush1.msra.mxu0 0.0
    %824 = vmatprep.subr.mxu0 0.0
    %825 = vmatpush1.msra.mxu0 0.0
    %826 = vmatprep.subr.mxu0 0.0
    %827 = vmatpush1.msra.mxu0 0.0
    %828 = vmatprep.subr.mxu0 0.0
    %829 = vmatpush1.msra.mxu0 0.0
    %830 = vmatprep.subr.mxu0 0.0
    %831 = vmatpush1.msra.mxu0 0.0
    %832 = vmatprep.subr.mxu0 0.0
    %833 = vmatpush1.msra.mxu0 0.0
    %834 = vmatprep.subr.mxu0 0.0
    %835 = vmatpush1.msra.mxu0 0.0
    %836 = vmatprep.subr.mxu0 0.0
    %837 = vmatpush1.msra.mxu0 0.0
    %838 = vmatprep.subr.mxu0 0.0
    %839 = vmatpush1.msra.mxu0 0.0
    %840 = vmatprep.subr.mxu0 0.0
    %841 = vmatpush1.msra.mxu0 0.0
    %842 = vmatprep.subr.mxu0 0.0
    %843 = vmatpush1.msra.mxu0 0.0
    %844 = vmatprep.subr.mxu0 0.0
    %845 = vmatpush1.msra.mxu0 0.0
    %846 = vmatprep.subr.mxu0 0.0
    %847 = vmatpush1.msra.mxu0 0.0
    %848 = vmatprep.subr.mxu0 0.0
    %849 = vmatpush1.msra.mxu0 0.0
    %850 = vmatprep.mubr.f32.mxu0 0.0
    %851 = vmatmul.mubr.f32.gmra.mrb[0].mxu0 %v642
    %v852 = vpop.f32.mrb[0].mxu0
    %v853 = vadd.f32 0.0, %v852
    %v854 = vpop.f32.mrb[0].mxu0
    %855 = vdwg.mxu0
    %v856 = vld [vmem:[%s14] sm:$0xff]
    %v857 = vld [vmem:[%s15] sm:$0xff]
    %v858 = vld [vmem:[%s16] sm:$0xff]
    %v859 = vmul.f32 %v711, %v711
    %v860 = vmul.f32 %v782, %v782
    %v861 = vadd.f32 %v859, %v860
    %v862 = vmul.f32 %v853, %v853
    %v863 = vadd.f32 %v861, %v862
    %v864 = vmax.f32 %v863, 1e-24
    %v865 = vrsqrt.pop %v864
    %v866 = vrsqrt.pop %v864
    %v867 = vmul.f32 %v864, %v866
    %vm868 = vcmp.eq.f32.partialorder %v864, inf
    %v869 = vsel %vm868, %v864, %v867
    %vm870 = vcmp.eq.f32.partialorder %v864, 0.0
    %v871 = vand.u32 %v864, 2147483648
    %v872 = vsel %vm870, %v871, %v869
    %v873 = vrot.slane %v872, 4
    %v874 = vadd.f32 %v872, %v873
    %v875 = vrot.slane %v874, 2
    %v876 = vadd.f32 %v874, %v875
    %v877 = vrot.slane %v876, 1
    %v878 = vadd.f32 %v876, %v877
    %v879 = vmul.f32 %v878, %v606
    %v880 = vsub.f32 %v872, %v879
    %v881 = vmul.f32 %v880, %v880
    %v882 = vrot.slane %v881, 4
    %v883 = vadd.f32 %v881, %v882
    %v884 = vrot.slane %v883, 2
    %v885 = vadd.f32 %v883, %v884
    %v886 = vrot.slane %v885, 1
    %v887 = vadd.f32 %v885, %v886
    %v888 = vmul.f32 %v887, %v606
    %v889 = vadd.f32 %v888, 1e-05
    %v890 = vrsqrt.pop %v889
    %v891 = vmul.f32 %v880, %v890
    %893 = vset.pattern.permute.xlu0 0
    %894 = vperm.xlu0 %893, %v856
    %v895 = vpop.permute.xlu0 %894
    %v897 = vmul.f32 %v891, %v895
    %899 = vset.pattern.permute.xlu0 0
    %900 = vperm.xlu0 %899, %v857
    %v901 = vpop.permute.xlu0 %900
    %v903 = vadd.f32 %v897, %v901
    %vm904 = vcmp.gt.f32.partialorder %v903, 0.0
    %v905 = vmin.f32 %v903, 0.0
    %v906 = vmul.f32 %v905, 1.442695
    %v907 = vpow.pop %v906
    %v908 = vsub.f32 %v907, 1.0
    %v909 = vsel %vm904, %v903, %v908
    %v910 = vmul.f32 %v909, %v865
    %v911 = vmul.f32 %v711, %v910
    %v913 = vsel %vm640, %v858, 0
    %915 = vmatprep.subr.mxu0 0.0
    %916 = vmatpush1.msra.mxu0 %v911
    %917 = vmatprep.subr.mxu0 0.0
    %918 = vmatpush1.msra.mxu0 0.0
    %919 = vmatprep.subr.mxu0 0.0
    %920 = vmatpush1.msra.mxu0 0.0
    %921 = vmatprep.subr.mxu0 0.0
    %922 = vmatpush1.msra.mxu0 0.0
    %923 = vmatprep.subr.mxu0 0.0
    %924 = vmatpush1.msra.mxu0 0.0
    %925 = vmatprep.subr.mxu0 0.0
    %926 = vmatpush1.msra.mxu0 0.0
    %927 = vmatprep.subr.mxu0 0.0
    %928 = vmatpush1.msra.mxu0 0.0
    %929 = vmatprep.subr.mxu0 0.0
    %930 = vmatpush1.msra.mxu0 0.0
    %931 = vmatprep.subr.mxu0 0.0
    %932 = vmatpush1.msra.mxu0 0.0
    %933 = vmatprep.subr.mxu0 0.0
    %934 = vmatpush1.msra.mxu0 0.0
    %935 = vmatprep.subr.mxu0 0.0
    %936 = vmatpush1.msra.mxu0 0.0
    %937 = vmatprep.subr.mxu0 0.0
    %938 = vmatpush1.msra.mxu0 0.0
    %939 = vmatprep.subr.mxu0 0.0
    %940 = vmatpush1.msra.mxu0 0.0
    %941 = vmatprep.subr.mxu0 0.0
    %942 = vmatpush1.msra.mxu0 0.0
    %943 = vmatprep.subr.mxu0 0.0
    %944 = vmatpush1.msra.mxu0 0.0
    %945 = vmatprep.subr.mxu0 0.0
    %946 = vmatpush1.msra.mxu0 0.0
    %947 = vmatprep.subr.mxu0 0.0
    %948 = vmatpush1.msra.mxu0 0.0
    %949 = vmatprep.subr.mxu0 0.0
    %950 = vmatpush1.msra.mxu0 0.0
    %951 = vmatprep.subr.mxu0 0.0
    %952 = vmatpush1.msra.mxu0 0.0
    %953 = vmatprep.subr.mxu0 0.0
    %954 = vmatpush1.msra.mxu0 0.0
    %955 = vmatprep.subr.mxu0 0.0
    %956 = vmatpush1.msra.mxu0 0.0
    %957 = vmatprep.subr.mxu0 0.0
    %958 = vmatpush1.msra.mxu0 0.0
    %959 = vmatprep.subr.mxu0 0.0
    %960 = vmatpush1.msra.mxu0 0.0
    %961 = vmatprep.subr.mxu0 0.0
    %962 = vmatpush1.msra.mxu0 0.0
    %963 = vmatprep.subr.mxu0 0.0
    %964 = vmatpush1.msra.mxu0 0.0
    %965 = vmatprep.subr.mxu0 0.0
    %966 = vmatpush1.msra.mxu0 0.0
    %967 = vmatprep.subr.mxu0 0.0
    %968 = vmatpush1.msra.mxu0 0.0
    %969 = vmatprep.subr.mxu0 0.0
    %970 = vmatpush1.msra.mxu0 0.0
    %971 = vmatprep.subr.mxu0 0.0
    %972 = vmatpush1.msra.mxu0 0.0
    %973 = vmatprep.subr.mxu0 0.0
    %974 = vmatpush1.msra.mxu0 0.0
    %975 = vmatprep.subr.mxu0 0.0
    %976 = vmatpush1.msra.mxu0 0.0
    %977 = vmatprep.subr.mxu0 0.0
    %978 = vmatpush1.msra.mxu0 0.0
    %979 = vmatprep.mubr.f32.mxu0 0.0
    %980 = vmatmul.mubr.f32.gmra.mrb[0].mxu0 %v913
    %v981 = vpop.f32.mrb[0].mxu0
    %v982 = vadd.f32 0.0, %v981
    %v983 = vpop.f32.mrb[0].mxu0
    %984 = vdwg.mxu0
    %v985 = vmul.f32 %v782, %v910
    %986 = vmatprep.subr.mxu0 0.0
    %987 = vmatpush1.msra.mxu0 %v985
    %988 = vmatprep.subr.mxu0 0.0
    %989 = vmatpush1.msra.mxu0 0.0
    %990 = vmatprep.subr.mxu0 0.0
    %991 = vmatpush1.msra.mxu0 0.0
    %992 = vmatprep.subr.mxu0 0.0
    %993 = vmatpush1.msra.mxu0 0.0
    %994 = vmatprep.subr.mxu0 0.0
    %995 = vmatpush1.msra.mxu0 0.0
    %996 = vmatprep.subr.mxu0 0.0
    %997 = vmatpush1.msra.mxu0 0.0
    %998 = vmatprep.subr.mxu0 0.0
    %999 = vmatpush1.msra.mxu0 0.0
    %1000 = vmatprep.subr.mxu0 0.0
    %1001 = vmatpush1.msra.mxu0 0.0
    %1002 = vmatprep.subr.mxu0 0.0
    %1003 = vmatpush1.msra.mxu0 0.0
    %1004 = vmatprep.subr.mxu0 0.0
    %1005 = vmatpush1.msra.mxu0 0.0
    %1006 = vmatprep.subr.mxu0 0.0
    %1007 = vmatpush1.msra.mxu0 0.0
    %1008 = vmatprep.subr.mxu0 0.0
    %1009 = vmatpush1.msra.mxu0 0.0
    %1010 = vmatprep.subr.mxu0 0.0
    %1011 = vmatpush1.msra.mxu0 0.0
    %1012 = vmatprep.subr.mxu0 0.0
    %1013 = vmatpush1.msra.mxu0 0.0
    %1014 = vmatprep.subr.mxu0 0.0
    %1015 = vmatpush1.msra.mxu0 0.0
    %1016 = vmatprep.subr.mxu0 0.0
    %1017 = vmatpush1.msra.mxu0 0.0
    %1018 = vmatprep.subr.mxu0 0.0
    %1019 = vmatpush1.msra.mxu0 0.0
    %1020 = vmatprep.subr.mxu0 0.0
    %1021 = vmatpush1.msra.mxu0 0.0
    %1022 = vmatprep.subr.mxu0 0.0
    %1023 = vmatpush1.msra.mxu0 0.0
    %1024 = vmatprep.subr.mxu0 0.0
    %1025 = vmatpush1.msra.mxu0 0.0
    %1026 = vmatprep.subr.mxu0 0.0
    %1027 = vmatpush1.msra.mxu0 0.0
    %1028 = vmatprep.subr.mxu0 0.0
    %1029 = vmatpush1.msra.mxu0 0.0
    %1030 = vmatprep.subr.mxu0 0.0
    %1031 = vmatpush1.msra.mxu0 0.0
    %1032 = vmatprep.subr.mxu0 0.0
    %1033 = vmatpush1.msra.mxu0 0.0
    %1034 = vmatprep.subr.mxu0 0.0
    %1035 = vmatpush1.msra.mxu0 0.0
    %1036 = vmatprep.subr.mxu0 0.0
    %1037 = vmatpush1.msra.mxu0 0.0
    %1038 = vmatprep.subr.mxu0 0.0
    %1039 = vmatpush1.msra.mxu0 0.0
    %1040 = vmatprep.subr.mxu0 0.0
    %1041 = vmatpush1.msra.mxu0 0.0
    %1042 = vmatprep.subr.mxu0 0.0
    %1043 = vmatpush1.msra.mxu0 0.0
    %1044 = vmatprep.subr.mxu0 0.0
    %1045 = vmatpush1.msra.mxu0 0.0
    %1046 = vmatprep.subr.mxu0 0.0
    %1047 = vmatpush1.msra.mxu0 0.0
    %1048 = vmatprep.subr.mxu0 0.0
    %1049 = vmatpush1.msra.mxu0 0.0
    %1050 = vmatprep.mubr.f32.mxu0 0.0
    %1051 = vmatmul.mubr.f32.gmra.mrb[0].mxu0 %v913
    %v1052 = vpop.f32.mrb[0].mxu0
    %v1053 = vadd.f32 0.0, %v1052
    %v1054 = vpop.f32.mrb[0].mxu0
    %1055 = vdwg.mxu0
    %v1056 = vmul.f32 %v853, %v910
    %1057 = vmatprep.subr.mxu0 0.0
    %1058 = vmatpush1.msra.mxu0 %v1056
    %1059 = vmatprep.subr.mxu0 0.0
    %1060 = vmatpush1.msra.mxu0 0.0
    %1061 = vmatprep.subr.mxu0 0.0
    %1062 = vmatpush1.msra.mxu0 0.0
    %1063 = vmatprep.subr.mxu0 0.0
    %1064 = vmatpush1.msra.mxu0 0.0
    %1065 = vmatprep.subr.mxu0 0.0
    %1066 = vmatpush1.msra.mxu0 0.0
    %1067 = vmatprep.subr.mxu0 0.0
    %1068 = vmatpush1.msra.mxu0 0.0
    %1069 = vmatprep.subr.mxu0 0.0
    %1070 = vmatpush1.msra.mxu0 0.0
    %1071 = vmatprep.subr.mxu0 0.0
    %1072 = vmatpush1.msra.mxu0 0.0
    %1073 = vmatprep.subr.mxu0 0.0
    %1074 = vmatpush1.msra.mxu0 0.0
    %1075 = vmatprep.subr.mxu0 0.0
    %1076 = vmatpush1.msra.mxu0 0.0
    %1077 = vmatprep.subr.mxu0 0.0
    %1078 = vmatpush1.msra.mxu0 0.0
    %1079 = vmatprep.subr.mxu0 0.0
    %1080 = vmatpush1.msra.mxu0 0.0
    %1081 = vmatprep.subr.mxu0 0.0
    %1082 = vmatpush1.msra.mxu0 0.0
    %1083 = vmatprep.subr.mxu0 0.0
    %1084 = vmatpush1.msra.mxu0 0.0
    %1085 = vmatprep.subr.mxu0 0.0
    %1086 = vmatpush1.msra.mxu0 0.0
    %1087 = vmatprep.subr.mxu0 0.0
    %1088 = vmatpush1.msra.mxu0 0.0
    %1089 = vmatprep.subr.mxu0 0.0
    %1090 = vmatpush1.msra.mxu0 0.0
    %1091 = vmatprep.subr.mxu0 0.0
    %1092 = vmatpush1.msra.mxu0 0.0
    %1093 = vmatprep.subr.mxu0 0.0
    %1094 = vmatpush1.msra.mxu0 0.0
    %1095 = vmatprep.subr.mxu0 0.0
    %1096 = vmatpush1.msra.mxu0 0.0
    %1097 = vmatprep.subr.mxu0 0.0
    %1098 = vmatpush1.msra.mxu0 0.0
    %1099 = vmatprep.subr.mxu0 0.0
    %1100 = vmatpush1.msra.mxu0 0.0
    %1101 = vmatprep.subr.mxu0 0.0
    %1102 = vmatpush1.msra.mxu0 0.0
    %1103 = vmatprep.subr.mxu0 0.0
    %1104 = vmatpush1.msra.mxu0 0.0
    %1105 = vmatprep.subr.mxu0 0.0
    %1106 = vmatpush1.msra.mxu0 0.0
    %1107 = vmatprep.subr.mxu0 0.0
    %1108 = vmatpush1.msra.mxu0 0.0
    %1109 = vmatprep.subr.mxu0 0.0
    %1110 = vmatpush1.msra.mxu0 0.0
    %1111 = vmatprep.subr.mxu0 0.0
    %1112 = vmatpush1.msra.mxu0 0.0
    %1113 = vmatprep.subr.mxu0 0.0
    %1114 = vmatpush1.msra.mxu0 0.0
    %1115 = vmatprep.subr.mxu0 0.0
    %1116 = vmatpush1.msra.mxu0 0.0
    %1117 = vmatprep.subr.mxu0 0.0
    %1118 = vmatpush1.msra.mxu0 0.0
    %1119 = vmatprep.subr.mxu0 0.0
    %1120 = vmatpush1.msra.mxu0 0.0
    %1121 = vmatprep.mubr.f32.mxu0 0.0
    %1122 = vmatmul.mubr.f32.gmra.mrb[0].mxu0 %v913
    %v1123 = vpop.f32.mrb[0].mxu0
    %v1124 = vadd.f32 0.0, %v1123
    %v1125 = vpop.f32.mrb[0].mxu0
    %1126 = vdwg.mxu0
    %v1127 = vld [vmem:[%s17] sm:$0xff]
    %v1128 = vld [vmem:[%s18] sm:$0xff]
    %v1129 = vld [vmem:[%s19] sm:$0x3]
    %v1130 = vmul.f32 %v982, %v982
    %v1131 = vmul.f32 %v1053, %v1053
    %v1132 = vadd.f32 %v1130, %v1131
    %v1133 = vmul.f32 %v1124, %v1124
    %v1134 = vadd.f32 %v1132, %v1133
    %v1135 = vmax.f32 %v1134, 1e-24
    %v1136 = vrsqrt.pop %v1135
    %v1137 = vrsqrt.pop %v1135
    %v1138 = vmul.f32 %v1135, %v1137
    %vm1139 = vcmp.eq.f32.partialorder %v1135, inf
    %v1140 = vsel %vm1139, %v1135, %v1138
    %vm1141 = vcmp.eq.f32.partialorder %v1135, 0.0
    %v1142 = vand.u32 %v1135, 2147483648
    %v1143 = vsel %vm1141, %v1142, %v1140
    %v1144 = vrot.slane %v1143, 4
    %v1145 = vadd.f32 %v1143, %v1144
    %v1146 = vrot.slane %v1145, 2
    %v1147 = vadd.f32 %v1145, %v1146
    %v1148 = vrot.slane %v1147, 1
    %v1149 = vadd.f32 %v1147, %v1148
    %v1150 = vmul.f32 %v1149, %v606
    %v1151 = vsub.f32 %v1143, %v1150
    %v1152 = vmul.f32 %v1151, %v1151
    %v1153 = vrot.slane %v1152, 4
    %v1154 = vadd.f32 %v1152, %v1153
    %v1155 = vrot.slane %v1154, 2
    %v1156 = vadd.f32 %v1154, %v1155
    %v1157 = vrot.slane %v1156, 1
    %v1158 = vadd.f32 %v1156, %v1157
    %v1159 = vmul.f32 %v1158, %v606
    %v1160 = vadd.f32 %v1159, 1e-05
    %v1161 = vrsqrt.pop %v1160
    %v1162 = vmul.f32 %v1151, %v1161
    %1164 = vset.pattern.permute.xlu0 0
    %1165 = vperm.xlu0 %1164, %v1127
    %v1166 = vpop.permute.xlu0 %1165
    %v1168 = vmul.f32 %v1162, %v1166
    %1170 = vset.pattern.permute.xlu0 0
    %1171 = vperm.xlu0 %1170, %v1128
    %v1172 = vpop.permute.xlu0 %1171
    %v1174 = vadd.f32 %v1168, %v1172
    %vm1175 = vcmp.gt.f32.partialorder %v1174, 0.0
    %v1176 = vmin.f32 %v1174, 0.0
    %v1177 = vmul.f32 %v1176, 1.442695
    %v1178 = vpow.pop %v1177
    %v1179 = vsub.f32 %v1178, 1.0
    %v1180 = vsel %vm1175, %v1174, %v1179
    %v1181 = vmul.f32 %v1180, %v1136
    %v1182 = vmul.f32 %v982, %v1181
    %v1184 = vsel %vm640, %v1129, 0
    %1186 = vmatprep.subr.mxu0 0.0
    %1187 = vmatpush1.msra.mxu0 %v1182
    %1188 = vmatprep.subr.mxu0 0.0
    %1189 = vmatpush1.msra.mxu0 0.0
    %1190 = vmatprep.subr.mxu0 0.0
    %1191 = vmatpush1.msra.mxu0 0.0
    %1192 = vmatprep.subr.mxu0 0.0
    %1193 = vmatpush1.msra.mxu0 0.0
    %1194 = vmatprep.subr.mxu0 0.0
    %1195 = vmatpush1.msra.mxu0 0.0
    %1196 = vmatprep.subr.mxu0 0.0
    %1197 = vmatpush1.msra.mxu0 0.0
    %1198 = vmatprep.subr.mxu0 0.0
    %1199 = vmatpush1.msra.mxu0 0.0
    %1200 = vmatprep.subr.mxu0 0.0
    %1201 = vmatpush1.msra.mxu0 0.0
    %1202 = vmatprep.subr.mxu0 0.0
    %1203 = vmatpush1.msra.mxu0 0.0
    %1204 = vmatprep.subr.mxu0 0.0
    %1205 = vmatpush1.msra.mxu0 0.0
    %1206 = vmatprep.subr.mxu0 0.0
    %1207 = vmatpush1.msra.mxu0 0.0
    %1208 = vmatprep.subr.mxu0 0.0
    %1209 = vmatpush1.msra.mxu0 0.0
    %1210 = vmatprep.subr.mxu0 0.0
    %1211 = vmatpush1.msra.mxu0 0.0
    %1212 = vmatprep.subr.mxu0 0.0
    %1213 = vmatpush1.msra.mxu0 0.0
    %1214 = vmatprep.subr.mxu0 0.0
    %1215 = vmatpush1.msra.mxu0 0.0
    %1216 = vmatprep.subr.mxu0 0.0
    %1217 = vmatpush1.msra.mxu0 0.0
    %1218 = vmatprep.subr.mxu0 0.0
    %1219 = vmatpush1.msra.mxu0 0.0
    %1220 = vmatprep.subr.mxu0 0.0
    %1221 = vmatpush1.msra.mxu0 0.0
    %1222 = vmatprep.subr.mxu0 0.0
    %1223 = vmatpush1.msra.mxu0 0.0
    %1224 = vmatprep.subr.mxu0 0.0
    %1225 = vmatpush1.msra.mxu0 0.0
    %1226 = vmatprep.subr.mxu0 0.0
    %1227 = vmatpush1.msra.mxu0 0.0
    %1228 = vmatprep.subr.mxu0 0.0
    %1229 = vmatpush1.msra.mxu0 0.0
    %1230 = vmatprep.subr.mxu0 0.0
    %1231 = vmatpush1.msra.mxu0 0.0
    %1232 = vmatprep.subr.mxu0 0.0
    %1233 = vmatpush1.msra.mxu0 0.0
    %1234 = vmatprep.subr.mxu0 0.0
    %1235 = vmatpush1.msra.mxu0 0.0
    %1236 = vmatprep.subr.mxu0 0.0
    %1237 = vmatpush1.msra.mxu0 0.0
    %1238 = vmatprep.subr.mxu0 0.0
    %1239 = vmatpush1.msra.mxu0 0.0
    %1240 = vmatprep.subr.mxu0 0.0
    %1241 = vmatpush1.msra.mxu0 0.0
    %1242 = vmatprep.subr.mxu0 0.0
    %1243 = vmatpush1.msra.mxu0 0.0
    %1244 = vmatprep.subr.mxu0 0.0
    %1245 = vmatpush1.msra.mxu0 0.0
    %1246 = vmatprep.subr.mxu0 0.0
    %1247 = vmatpush1.msra.mxu0 0.0
    %1248 = vmatprep.subr.mxu0 0.0
    %1249 = vmatpush1.msra.mxu0 0.0
    %1250 = vmatprep.mubr.f32.mxu0 0.0
    %1251 = vmatmul.mubr.f32.gmra.mrb[0].mxu0 %v1184
    %v1252 = vpop.f32.mrb[0].mxu0
    %v1253 = vadd.f32 0.0, %v1252
    %v1254 = vpop.f32.mrb[0].mxu0
    %1255 = vdwg.mxu0
    %v1256 = vmul.f32 %v1053, %v1181
    %1257 = vmatprep.subr.mxu0 0.0
    %1258 = vmatpush1.msra.mxu0 %v1256
    %1259 = vmatprep.subr.mxu0 0.0
    %1260 = vmatpush1.msra.mxu0 0.0
    %1261 = vmatprep.subr.mxu0 0.0
    %1262 = vmatpush1.msra.mxu0 0.0
    %1263 = vmatprep.subr.mxu0 0.0
    %1264 = vmatpush1.msra.mxu0 0.0
    %1265 = vmatprep.subr.mxu0 0.0
    %1266 = vmatpush1.msra.mxu0 0.0
    %1267 = vmatprep.subr.mxu0 0.0
    %1268 = vmatpush1.msra.mxu0 0.0
    %1269 = vmatprep.subr.mxu0 0.0
    %1270 = vmatpush1.msra.mxu0 0.0
    %1271 = vmatprep.subr.mxu0 0.0
    %1272 = vmatpush1.msra.mxu0 0.0
    %1273 = vmatprep.subr.mxu0 0.0
    %1274 = vmatpush1.msra.mxu0 0.0
    %1275 = vmatprep.subr.mxu0 0.0
    %1276 = vmatpush1.msra.mxu0 0.0
    %1277 = vmatprep.subr.mxu0 0.0
    %1278 = vmatpush1.msra.mxu0 0.0
    %1279 = vmatprep.subr.mxu0 0.0
    %1280 = vmatpush1.msra.mxu0 0.0
    %1281 = vmatprep.subr.mxu0 0.0
    %1282 = vmatpush1.msra.mxu0 0.0
    %1283 = vmatprep.subr.mxu0 0.0
    %1284 = vmatpush1.msra.mxu0 0.0
    %1285 = vmatprep.subr.mxu0 0.0
    %1286 = vmatpush1.msra.mxu0 0.0
    %1287 = vmatprep.subr.mxu0 0.0
    %1288 = vmatpush1.msra.mxu0 0.0
    %1289 = vmatprep.subr.mxu0 0.0
    %1290 = vmatpush1.msra.mxu0 0.0
    %1291 = vmatprep.subr.mxu0 0.0
    %1292 = vmatpush1.msra.mxu0 0.0
    %1293 = vmatprep.subr.mxu0 0.0
    %1294 = vmatpush1.msra.mxu0 0.0
    %1295 = vmatprep.subr.mxu0 0.0
    %1296 = vmatpush1.msra.mxu0 0.0
    %1297 = vmatprep.subr.mxu0 0.0
    %1298 = vmatpush1.msra.mxu0 0.0
    %1299 = vmatprep.subr.mxu0 0.0
    %1300 = vmatpush1.msra.mxu0 0.0
    %1301 = vmatprep.subr.mxu0 0.0
    %1302 = vmatpush1.msra.mxu0 0.0
    %1303 = vmatprep.subr.mxu0 0.0
    %1304 = vmatpush1.msra.mxu0 0.0
    %1305 = vmatprep.subr.mxu0 0.0
    %1306 = vmatpush1.msra.mxu0 0.0
    %1307 = vmatprep.subr.mxu0 0.0
    %1308 = vmatpush1.msra.mxu0 0.0
    %1309 = vmatprep.subr.mxu0 0.0
    %1310 = vmatpush1.msra.mxu0 0.0
    %1311 = vmatprep.subr.mxu0 0.0
    %1312 = vmatpush1.msra.mxu0 0.0
    %1313 = vmatprep.subr.mxu0 0.0
    %1314 = vmatpush1.msra.mxu0 0.0
    %1315 = vmatprep.subr.mxu0 0.0
    %1316 = vmatpush1.msra.mxu0 0.0
    %1317 = vmatprep.subr.mxu0 0.0
    %1318 = vmatpush1.msra.mxu0 0.0
    %1319 = vmatprep.subr.mxu0 0.0
    %1320 = vmatpush1.msra.mxu0 0.0
    %1321 = vmatprep.mubr.f32.mxu0 0.0
    %1322 = vmatmul.mubr.f32.gmra.mrb[0].mxu0 %v1184
    %v1323 = vpop.f32.mrb[0].mxu0
    %v1324 = vadd.f32 0.0, %v1323
    %v1325 = vpop.f32.mrb[0].mxu0
    %1326 = vdwg.mxu0
    %v1327 = vmul.f32 %v1124, %v1181
    %1328 = vmatprep.subr.mxu0 0.0
    %1329 = vmatpush1.msra.mxu0 %v1327
    %1330 = vmatprep.subr.mxu0 0.0
    %1331 = vmatpush1.msra.mxu0 0.0
    %1332 = vmatprep.subr.mxu0 0.0
    %1333 = vmatpush1.msra.mxu0 0.0
    %1334 = vmatprep.subr.mxu0 0.0
    %1335 = vmatpush1.msra.mxu0 0.0
    %1336 = vmatprep.subr.mxu0 0.0
    %1337 = vmatpush1.msra.mxu0 0.0
    %1338 = vmatprep.subr.mxu0 0.0
    %1339 = vmatpush1.msra.mxu0 0.0
    %1340 = vmatprep.subr.mxu0 0.0
    %1341 = vmatpush1.msra.mxu0 0.0
    %1342 = vmatprep.subr.mxu0 0.0
    %1343 = vmatpush1.msra.mxu0 0.0
    %1344 = vmatprep.subr.mxu0 0.0
    %1345 = vmatpush1.msra.mxu0 0.0
    %1346 = vmatprep.subr.mxu0 0.0
    %1347 = vmatpush1.msra.mxu0 0.0
    %1348 = vmatprep.subr.mxu0 0.0
    %1349 = vmatpush1.msra.mxu0 0.0
    %1350 = vmatprep.subr.mxu0 0.0
    %1351 = vmatpush1.msra.mxu0 0.0
    %1352 = vmatprep.subr.mxu0 0.0
    %1353 = vmatpush1.msra.mxu0 0.0
    %1354 = vmatprep.subr.mxu0 0.0
    %1355 = vmatpush1.msra.mxu0 0.0
    %1356 = vmatprep.subr.mxu0 0.0
    %1357 = vmatpush1.msra.mxu0 0.0
    %1358 = vmatprep.subr.mxu0 0.0
    %1359 = vmatpush1.msra.mxu0 0.0
    %1360 = vmatprep.subr.mxu0 0.0
    %1361 = vmatpush1.msra.mxu0 0.0
    %1362 = vmatprep.subr.mxu0 0.0
    %1363 = vmatpush1.msra.mxu0 0.0
    %1364 = vmatprep.subr.mxu0 0.0
    %1365 = vmatpush1.msra.mxu0 0.0
    %1366 = vmatprep.subr.mxu0 0.0
    %1367 = vmatpush1.msra.mxu0 0.0
    %1368 = vmatprep.subr.mxu0 0.0
    %1369 = vmatpush1.msra.mxu0 0.0
    %1370 = vmatprep.subr.mxu0 0.0
    %1371 = vmatpush1.msra.mxu0 0.0
    %1372 = vmatprep.subr.mxu0 0.0
    %1373 = vmatpush1.msra.mxu0 0.0
    %1374 = vmatprep.subr.mxu0 0.0
    %1375 = vmatpush1.msra.mxu0 0.0
    %1376 = vmatprep.subr.mxu0 0.0
    %1377 = vmatpush1.msra.mxu0 0.0
    %1378 = vmatprep.subr.mxu0 0.0
    %1379 = vmatpush1.msra.mxu0 0.0
    %1380 = vmatprep.subr.mxu0 0.0
    %1381 = vmatpush1.msra.mxu0 0.0
    %1382 = vmatprep.subr.mxu0 0.0
    %1383 = vmatpush1.msra.mxu0 0.0
    %1384 = vmatprep.subr.mxu0 0.0
    %1385 = vmatpush1.msra.mxu0 0.0
    %1386 = vmatprep.subr.mxu0 0.0
    %1387 = vmatpush1.msra.mxu0 0.0
    %1388 = vmatprep.subr.mxu0 0.0
    %1389 = vmatpush1.msra.mxu0 0.0
    %1390 = vmatprep.subr.mxu0 0.0
    %1391 = vmatpush1.msra.mxu0 0.0
    %1392 = vmatprep.mubr.f32.mxu0 0.0
    %1393 = vmatmul.mubr.f32.gmra.mrb[0].mxu0 %v1184
    %v1394 = vpop.f32.mrb[0].mxu0
    %v1395 = vadd.f32 0.0, %v1394
    %v1396 = vpop.f32.mrb[0].mxu0
    %1397 = vdwg.mxu0
    %1398 = vst [vmem:[#allocation4] sm:$0x3] %v1253
    %s1399 = scalar_lea.vmem [#allocation4], 2
    %1400 = vst [vmem:[%s1399] sm:$0x3] %v1324
    %s1401 = scalar_lea.vmem [#allocation4], 4
    %1402 = vst [vmem:[%s1401] sm:$0x3] %v1395
    // Predicated region
    $region82: #{tpu_custom_call.1} parent=1 // pred_check
      _
    $region83: #{tpu_custom_call.1} parent=1 // pred_check_branch
      %1404 = sbr.rel (0) target = $region85
    $region84: #{tpu_custom_call.1} parent=1 // pred_region
      %s1406 = ssub.s32 64, 64
      %1407 = vsyncadd [#allocation3], %s1406
      %s1409 = sshll.u32 [#allocation2], 4
      %s1410 = int_to_ptr.vmem [resolvable:$true] %s1409
      %1412 = dma.vmem_to_hbm [thread:$0]  %s1410, 64, %s20, [#allocation3]
    $region85: #{tpu_custom_call.1} parent=1 // pred_fallthru
      _
    // Predicated region
    $region86: #{tpu_custom_call.1} parent=1 // pred_check
      _
    $region87: #{tpu_custom_call.1} parent=1 // pred_check_branch
      %1414 = sbr.rel (0) target = $region89
    $region88: #{tpu_custom_call.1} parent=1 // pred_region
      %s1416 = ssub.s32 96, 96
      %1417 = vsyncadd [#allocation5], %s1416
      %s1418 = sshll.u32 [#allocation4], 4
      %s1419 = int_to_ptr.vmem [resolvable:$true] %s1418
      %1424 = dma.vmem_to_hbm [thread:$0]  %s1419, 96, %s21, [#allocation5], 32, 32, 2
    $region89: #{tpu_custom_call.1} parent=1 // pred_fallthru
      _
    // Predicated region
    $region90: #{tpu_custom_call.1} parent=1 // pred_check
      _
    $region91: #{tpu_custom_call.1} parent=1 // pred_check_branch
      %1426 = sbr.rel (0) target = $region93
    $region92: #{tpu_custom_call.1} parent=1 // pred_region
      %1427 = dma.done [#allocation3], 64
    $region93: #{tpu_custom_call.1} parent=1 // pred_fallthru
      _
    // Predicated region
    $region94: #{tpu_custom_call.1} parent=1 // pred_check
      _
    $region95: #{tpu_custom_call.1} parent=1 // pred_check_branch
      %1429 = sbr.rel (0) target = $region97
    $region96: #{tpu_custom_call.1} parent=1 // pred_region
      %1430 = dma.done [#allocation5], 96
    $region97: #{tpu_custom_call.1} parent=1 // pred_fallthru
      _
    %1431 = vsyncpa [#allocation3], 1
    %1432 = vsyncpa [#allocation5], 1

</llo_original>
